<compile_context>
chip_gen: v7x
topology: tpu7x:2x2x1
jax: 0.10.0
libtpu: 0.0.40
codegen_flags: <defaults>
</compile_context>

<pallas_src>
import functools

import jax
import jax.numpy as jnp
from jax import lax
from jax.experimental import pallas as pl
from jax.experimental.pallas import tpu as pltpu

HIDDEN = 64


def _lstm_recurrent_kernel(gates_ref, whh_ref, rout_ref, h_sc, c_sc, *,
                           t_blk, unroll):
    """One grid step = t_blk timesteps of the LSTM recurrence.

    gates_ref : (t_blk, B, 4H)  precomputed  x_t @ W_ih^T + (b_ih + b_hh)
    whh_ref   : (H, 4H)         recurrent weights (transposed)
    rout_ref  : (t_blk, B, H)   hidden-state outputs (r_out slab, lane-dense)
    h_sc,c_sc : (B, H)          recurrent state, persists across grid steps
    """
    H = HIDDEN

    @pl.when(pl.program_id(0) == 0)
    def _init():
        h_sc[...] = jnp.zeros_like(h_sc)
        c_sc[...] = jnp.zeros_like(c_sc)

    whh = whh_ref[...]                                    # load once per block

    def lstm_step(t, h, c):
        gates = gates_ref[t] + jnp.dot(h, whh, preferred_element_type=jnp.float32)
        # PyTorch gate order: input, forget, cell (g), output.
        i_g = jax.nn.sigmoid(gates[:, 0 * H:1 * H])
        f_g = jax.nn.sigmoid(gates[:, 1 * H:2 * H])
        g_g = jnp.tanh(gates[:, 2 * H:3 * H])
        o_g = jax.nn.sigmoid(gates[:, 3 * H:4 * H])
        c_new = f_g * c + i_g * g_g
        h_new = o_g * jnp.tanh(c_new)
        rout_ref[t] = h_new
        return h_new, c_new

    def unrolled_body(j, carry):
        h, c = carry
        base = j * unroll
        for u in range(unroll):                           # static unroll
            h, c = lstm_step(base + u, h, c)
        return h, c

    h_fin, c_fin = lax.fori_loop(0, t_blk // unroll, unrolled_body,
                                 (h_sc[...], c_sc[...]))
    h_sc[...] = h_fin
    c_sc[...] = c_fin


def rnn_forward(x, w_ih, w_hh, b_ih, b_hh, w_out, b_out):
    """x: (B, T, I) float32 (batch_first).  Returns (B, T, 1) float32."""
    B, T, I = x.shape
    H = HIDDEN

    x = x.astype(jnp.float32)
    wih_t = jnp.transpose(w_ih).astype(jnp.float32)        # (I, 4H)
    whh_t = jnp.transpose(w_hh).astype(jnp.float32)        # (H, 4H)
    bias = (b_ih + b_hh).astype(jnp.float32)               # (4H,)
    wout_t = jnp.transpose(w_out).astype(jnp.float32)      # (H, 1)

    # --- Hoisted input projection: one big matmul over all timesteps -> (T, B, 4H).
    gates_in = jnp.einsum("bti,ig->tbg", x, wih_t) + bias

    # Time block size: amortize grid-step overhead while keeping the double-buffered
    # gates/out slabs comfortably inside scoped VMEM (also fits v7x's smaller VMEM).
    budget = (4 * 1024 * 1024) // max(1, B * 4 * H * 4)
    t_blk = max(1, min(T, 512, budget))
    if t_blk >= 8:
        t_blk = (t_blk // 8) * 8                           # nice unroll multiple
    unroll = next(u for u in (8, 4, 2, 1) if t_blk % u == 0)

    # Pad time to a multiple of t_blk so every block has a static trip count; the
    # padded tail is computed on zero gate-inputs and sliced off afterwards (only
    # r_out is consumed downstream, so trailing-state corruption is irrelevant).
    T_pad = pl.cdiv(T, t_blk) * t_blk
    if T_pad != T:
        gates_in = jnp.pad(gates_in, ((0, T_pad - T), (0, 0), (0, 0)))

    grid = (T_pad // t_blk,)

    r_out = pl.pallas_call(
        functools.partial(_lstm_recurrent_kernel, t_blk=t_blk, unroll=unroll),
        out_shape=jax.ShapeDtypeStruct((T_pad, B, H), jnp.float32),
        grid_spec=pltpu.PrefetchScalarGridSpec(
            num_scalar_prefetch=0,
            grid=grid,
            in_specs=[
                pl.BlockSpec((t_blk, B, 4 * H), lambda b: (b, 0, 0)),   # gates_in
                pl.BlockSpec((H, 4 * H), lambda b: (0, 0)),             # W_hh^T
            ],
            out_specs=pl.BlockSpec((t_blk, B, H), lambda b: (b, 0, 0)),
            scratch_shapes=[
                pltpu.VMEM((B, H), jnp.float32),   # h state
                pltpu.VMEM((B, H), jnp.float32),   # c state
            ],
        ),
        compiler_params=pltpu.CompilerParams(
            dimension_semantics=("arbitrary",),    # recurrence: time blocks are serial
        ),
    )(gates_in, whh_t)

    # TODO(synk): nn.Dropout(0.1) is identity in eval mode; training-mode dropout would
    # use pltpu.prng_random_bits on r_out before the projection.

    # --- Hoisted output projection: one big (T*B, H) @ (H, 1) matmul -> (B, T, 1).
    out = jnp.einsum("tbh,ho->bto", r_out[:T], wout_t) + b_out.astype(jnp.float32)
    return out


def _rnn_reference(x, w_ih, w_hh, b_ih, b_hh, w_out, b_out):
    """Pure-JAX reference matching PyTorch LSTM + Linear semantics."""
    B, T, I = x.shape
    H = HIDDEN
    bias = b_ih + b_hh

    def step(carry, x_t):
        h, c = carry
        g = x_t @ w_ih.T + h @ w_hh.T + bias
        i = jax.nn.sigmoid(g[:, 0 * H:1 * H])
        f = jax.nn.sigmoid(g[:, 1 * H:2 * H])
        gg = jnp.tanh(g[:, 2 * H:3 * H])
        o = jax.nn.sigmoid(g[:, 3 * H:4 * H])
        c = f * c + i * gg
        h = o * jnp.tanh(c)
        return (h, c), h

    h0 = jnp.zeros((B, H), jnp.float32)
    _, hs = lax.scan(step, (h0, h0), jnp.transpose(x, (1, 0, 2)))
    r_out = jnp.transpose(hs, (1, 0, 2))            # (B, T, H)
    return r_out @ w_out.T + b_out


if __name__ == "__main__":
    key = jax.random.PRNGKey(0)
    B, T, I, H = 2, 8, 32, HIDDEN

    k = jax.random.split(key, 7)
    bound = 1.0 / jnp.sqrt(H)
    # PyTorch LSTM / Linear default init: U(-1/sqrt(H), 1/sqrt(H))
    w_ih = jax.random.uniform(k[0], (4 * H, I), jnp.float32, -bound, bound)
    w_hh = jax.random.uniform(k[1], (4 * H, H), jnp.float32, -bound, bound)
    b_ih = jax.random.uniform(k[2], (4 * H,), jnp.float32, -bound, bound)
    b_hh = jax.random.uniform(k[3], (4 * H,), jnp.float32, -bound, bound)
    w_out = jax.random.uniform(k[4], (1, H), jnp.float32, -bound, bound)
    b_out = jax.random.uniform(k[5], (1,), jnp.float32, -bound, bound)

    x = jax.random.normal(k[6], (B, T, I), jnp.float32)

    out = rnn_forward(x, w_ih, w_hh, b_ih, b_hh, w_out, b_out)
    jax.block_until_ready(out)
    assert out.shape == (B, T, 1), out.shape

    ref = _rnn_reference(x, w_ih, w_hh, b_ih, b_hh, w_out, b_out)
    max_err = float(jnp.max(jnp.abs(out - ref)))
    assert max_err < 2e-3, f"max abs error vs reference: {max_err}"

    print("KERNEL_OK")
</pallas_src>

<mosaic_0001>
module attributes {stable_mosaic.version = 11 : i64} {
  func.func @_lstm_recurrent_kernel(%arg0: i32, %arg1: memref<8x2x256xf32, #tpu.memory_space<vmem>>, %arg2: memref<64x256xf32, #tpu.memory_space<vmem>>, %arg3: memref<8x2x64xf32, #tpu.memory_space<vmem>>, %arg4: memref<2x64xf32, #tpu.memory_space<vmem>>, %arg5: memref<2x64xf32, #tpu.memory_space<vmem>>) attributes {dimension_semantics = [#tpu.dimension_semantics<arbitrary>], iteration_bounds = array<i64: 1>, scalar_prefetch = 0 : i64, scratch_operands = 2 : i64, tpu.core_type = #tpu.core_type<tc>, window_params = [{transform_indices = @transform_0, window_bounds = array<i64: 8, 2, 256>}, {pipeline_mode = #tpu.pipeline_mode<synchronous>, transform_indices = @transform_1, window_bounds = array<i64: 64, 256>}, {transform_indices = @transform_2, window_bounds = array<i64: 8, 2, 64>}]} {
    %c0_i32 = arith.constant 0 : i32
    %0 = arith.cmpi eq, %arg0, %c0_i32 : i32
    %1 = arith.extui %0 : i1 to i32
    %c0_i32_0 = arith.constant 0 : i32
    %2 = arith.cmpi ne, %1, %c0_i32_0 : i32
    scf.if %2 {
      %cst_76 = arith.constant 0.000000e+00 : f32
      %289 = vector.broadcast %cst_76 : f32 to vector<2x64xf32>
      %c0_77 = arith.constant 0 : index
      %c0_78 = arith.constant 0 : index
      %290 = vector.load %arg4[%c0_77, %c0_78] : memref<2x64xf32, #tpu.memory_space<vmem>>, vector<2x64xf32>
      tpu.vector_store %arg4[%c0_77, %c0_78], %289 {strides = array<i32>} : memref<2x64xf32, #tpu.memory_space<vmem>>, vector<2x64xf32>,
      %cst_79 = arith.constant 0.000000e+00 : f32
      %291 = vector.broadcast %cst_79 : f32 to vector<2x64xf32>
      %c0_80 = arith.constant 0 : index
      %c0_81 = arith.constant 0 : index
      %292 = vector.load %arg5[%c0_80, %c0_81] : memref<2x64xf32, #tpu.memory_space<vmem>>, vector<2x64xf32>
      tpu.vector_store %arg5[%c0_80, %c0_81], %291 {strides = array<i32>} : memref<2x64xf32, #tpu.memory_space<vmem>>, vector<2x64xf32>,
    } else {
    }
    %c0 = arith.constant 0 : index
    %c0_1 = arith.constant 0 : index
    %3 = vector.load %arg2[%c0, %c0_1] : memref<64x256xf32, #tpu.memory_space<vmem>>, vector<64x256xf32>
    %c0_2 = arith.constant 0 : index
    %c0_3 = arith.constant 0 : index
    %4 = vector.load %arg4[%c0_2, %c0_3] : memref<2x64xf32, #tpu.memory_space<vmem>>, vector<2x64xf32>
    %c0_4 = arith.constant 0 : index
    %c0_5 = arith.constant 0 : index
    %5 = vector.load %arg5[%c0_4, %c0_5] : memref<2x64xf32, #tpu.memory_space<vmem>>, vector<2x64xf32>
    %c0_i32_6 = arith.constant 0 : i32
    %c8_i32 = arith.constant 8 : i32
    %6 = arith.muli %c0_i32_6, %c8_i32 : i32
    %c0_i32_7 = arith.constant 0 : i32
    %7 = arith.addi %6, %c0_i32_7 : i32
    %8 = arith.index_cast %7 : i32 to index
    %c0_8 = arith.constant 0 : index
    %c0_9 = arith.constant 0 : index
    %9 = vector.load %arg1[%8, %c0_8, %c0_9] : memref<8x2x256xf32, #tpu.memory_space<vmem>>, vector<1x2x256xf32>
    %10 = vector.shape_cast %9 : vector<1x2x256xf32> to vector<2x256xf32>
    %cst = arith.constant dense<0.000000e+00> : vector<2x256xf32>
    %11 = tpu.matmul %4, %3, %cst {dimension_numbers = #tpu.dot_dimension_numbers<[1], [0], [0], [1], [0, 0, 1, 1], [], []>} : vector<2x64xf32>, vector<64x256xf32>, vector<2x256xf32> -> vector<2x256xf32>
    %12 = arith.addf %10, %11 : vector<2x256xf32>
    %13 = vector.extract_strided_slice %12 {offsets = [0, 0], sizes = [2, 64], strides = [1, 1]} : vector<2x256xf32> to vector<2x64xf32>
    %14 = arith.negf %13 : vector<2x64xf32>
    %15 = math.exp %14 : vector<2x64xf32>
    %cst_10 = arith.constant 1.000000e+00 : f32
    %16 = vector.broadcast %cst_10 : f32 to vector<2x64xf32>
    %17 = arith.addf %16, %15 : vector<2x64xf32>
    %18 = arith.divf %16, %17 : vector<2x64xf32>
    %19 = vector.extract_strided_slice %12 {offsets = [0, 64], sizes = [2, 64], strides = [1, 1]} : vector<2x256xf32> to vector<2x64xf32>
    %20 = arith.negf %19 : vector<2x64xf32>
    %21 = math.exp %20 : vector<2x64xf32>
    %cst_11 = arith.constant 1.000000e+00 : f32
    %22 = vector.broadcast %cst_11 : f32 to vector<2x64xf32>
    %23 = arith.addf %22, %21 : vector<2x64xf32>
    %24 = arith.divf %22, %23 : vector<2x64xf32>
    %25 = vector.extract_strided_slice %12 {offsets = [0, 128], sizes = [2, 64], strides = [1, 1]} : vector<2x256xf32> to vector<2x64xf32>
    %26 = math.tanh %25 : vector<2x64xf32>
    %27 = vector.extract_strided_slice %12 {offsets = [0, 192], sizes = [2, 64], strides = [1, 1]} : vector<2x256xf32> to vector<2x64xf32>
    %28 = arith.negf %27 : vector<2x64xf32>
    %29 = math.exp %28 : vector<2x64xf32>
    %cst_12 = arith.constant 1.000000e+00 : f32
    %30 = vector.broadcast %cst_12 : f32 to vector<2x64xf32>
    %31 = arith.addf %30, %29 : vector<2x64xf32>
    %32 = arith.divf %30, %31 : vector<2x64xf32>
    %33 = arith.mulf %24, %5 : vector<2x64xf32>
    %34 = arith.mulf %18, %26 : vector<2x64xf32>
    %35 = arith.addf %33, %34 : vector<2x64xf32>
    %36 = math.tanh %35 : vector<2x64xf32>
    %37 = arith.mulf %32, %36 : vector<2x64xf32>
    %38 = arith.index_cast %7 : i32 to index
    %c0_13 = arith.constant 0 : index
    %c0_14 = arith.constant 0 : index
    %39 = vector.load %arg3[%38, %c0_13, %c0_14] : memref<8x2x64xf32, #tpu.memory_space<vmem>>, vector<1x2x64xf32>
    %40 = vector.shape_cast %39 : vector<1x2x64xf32> to vector<2x64xf32>
    %41 = vector.shape_cast %37 : vector<2x64xf32> to vector<1x2x64xf32>
    tpu.vector_store %arg3[%38, %c0_13, %c0_14], %41 {strides = array<i32>} : memref<8x2x64xf32, #tpu.memory_space<vmem>>, vector<1x2x64xf32>,
    %c1_i32 = arith.constant 1 : i32
    %42 = arith.addi %6, %c1_i32 : i32
    %43 = arith.index_cast %42 : i32 to index
    %c0_15 = arith.constant 0 : index
    %c0_16 = arith.constant 0 : index
    %44 = vector.load %arg1[%43, %c0_15, %c0_16] : memref<8x2x256xf32, #tpu.memory_space<vmem>>, vector<1x2x256xf32>
    %45 = vector.shape_cast %44 : vector<1x2x256xf32> to vector<2x256xf32>
    %cst_17 = arith.constant dense<0.000000e+00> : vector<2x256xf32>
    %46 = tpu.matmul %37, %3, %cst_17 {dimension_numbers = #tpu.dot_dimension_numbers<[1], [0], [0], [1], [0, 0, 1, 1], [], []>} : vector<2x64xf32>, vector<64x256xf32>, vector<2x256xf32> -> vector<2x256xf32>
    %47 = arith.addf %45, %46 : vector<2x256xf32>
    %48 = vector.extract_strided_slice %47 {offsets = [0, 0], sizes = [2, 64], strides = [1, 1]} : vector<2x256xf32> to vector<2x64xf32>
    %49 = arith.negf %48 : vector<2x64xf32>
    %50 = math.exp %49 : vector<2x64xf32>
    %cst_18 = arith.constant 1.000000e+00 : f32
    %51 = vector.broadcast %cst_18 : f32 to vector<2x64xf32>
    %52 = arith.addf %51, %50 : vector<2x64xf32>
    %53 = arith.divf %51, %52 : vector<2x64xf32>
    %54 = vector.extract_strided_slice %47 {offsets = [0, 64], sizes = [2, 64], strides = [1, 1]} : vector<2x256xf32> to vector<2x64xf32>
    %55 = arith.negf %54 : vector<2x64xf32>
    %56 = math.exp %55 : vector<2x64xf32>
    %cst_19 = arith.constant 1.000000e+00 : f32
    %57 = vector.broadcast %cst_19 : f32 to vector<2x64xf32>
    %58 = arith.addf %57, %56 : vector<2x64xf32>
    %59 = arith.divf %57, %58 : vector<2x64xf32>
    %60 = vector.extract_strided_slice %47 {offsets = [0, 128], sizes = [2, 64], strides = [1, 1]} : vector<2x256xf32> to vector<2x64xf32>
    %61 = math.tanh %60 : vector<2x64xf32>
    %62 = vector.extract_strided_slice %47 {offsets = [0, 192], sizes = [2, 64], strides = [1, 1]} : vector<2x256xf32> to vector<2x64xf32>
    %63 = arith.negf %62 : vector<2x64xf32>
    %64 = math.exp %63 : vector<2x64xf32>
    %cst_20 = arith.constant 1.000000e+00 : f32
    %65 = vector.broadcast %cst_20 : f32 to vector<2x64xf32>
    %66 = arith.addf %65, %64 : vector<2x64xf32>
    %67 = arith.divf %65, %66 : vector<2x64xf32>
    %68 = arith.mulf %59, %35 : vector<2x64xf32>
    %69 = arith.mulf %53, %61 : vector<2x64xf32>
    %70 = arith.addf %68, %69 : vector<2x64xf32>
    %71 = math.tanh %70 : vector<2x64xf32>
    %72 = arith.mulf %67, %71 : vector<2x64xf32>
    %73 = arith.index_cast %42 : i32 to index
    %c0_21 = arith.constant 0 : index
    %c0_22 = arith.constant 0 : index
    %74 = vector.load %arg3[%73, %c0_21, %c0_22] : memref<8x2x64xf32, #tpu.memory_space<vmem>>, vector<1x2x64xf32>
    %75 = vector.shape_cast %74 : vector<1x2x64xf32> to vector<2x64xf32>
    %76 = vector.shape_cast %72 : vector<2x64xf32> to vector<1x2x64xf32>
    tpu.vector_store %arg3[%73, %c0_21, %c0_22], %76 {strides = array<i32>} : memref<8x2x64xf32, #tpu.memory_space<vmem>>, vector<1x2x64xf32>,
    %c2_i32 = arith.constant 2 : i32
    %77 = arith.addi %6, %c2_i32 : i32
    %78 = arith.index_cast %77 : i32 to index
    %c0_23 = arith.constant 0 : index
    %c0_24 = arith.constant 0 : index
    %79 = vector.load %arg1[%78, %c0_23, %c0_24] : memref<8x2x256xf32, #tpu.memory_space<vmem>>, vector<1x2x256xf32>
    %80 = vector.shape_cast %79 : vector<1x2x256xf32> to vector<2x256xf32>
    %cst_25 = arith.constant dense<0.000000e+00> : vector<2x256xf32>
    %81 = tpu.matmul %72, %3, %cst_25 {dimension_numbers = #tpu.dot_dimension_numbers<[1], [0], [0], [1], [0, 0, 1, 1], [], []>} : vector<2x64xf32>, vector<64x256xf32>, vector<2x256xf32> -> vector<2x256xf32>
    %82 = arith.addf %80, %81 : vector<2x256xf32>
    %83 = vector.extract_strided_slice %82 {offsets = [0, 0], sizes = [2, 64], strides = [1, 1]} : vector<2x256xf32> to vector<2x64xf32>
    %84 = arith.negf %83 : vector<2x64xf32>
    %85 = math.exp %84 : vector<2x64xf32>
    %cst_26 = arith.constant 1.000000e+00 : f32
    %86 = vector.broadcast %cst_26 : f32 to vector<2x64xf32>
    %87 = arith.addf %86, %85 : vector<2x64xf32>
    %88 = arith.divf %86, %87 : vector<2x64xf32>
    %89 = vector.extract_strided_slice %82 {offsets = [0, 64], sizes = [2, 64], strides = [1, 1]} : vector<2x256xf32> to vector<2x64xf32>
    %90 = arith.negf %89 : vector<2x64xf32>
    %91 = math.exp %90 : vector<2x64xf32>
    %cst_27 = arith.constant 1.000000e+00 : f32
    %92 = vector.broadcast %cst_27 : f32 to vector<2x64xf32>
    %93 = arith.addf %92, %91 : vector<2x64xf32>
    %94 = arith.divf %92, %93 : vector<2x64xf32>
    %95 = vector.extract_strided_slice %82 {offsets = [0, 128], sizes = [2, 64], strides = [1, 1]} : vector<2x256xf32> to vector<2x64xf32>
    %96 = math.tanh %95 : vector<2x64xf32>
    %97 = vector.extract_strided_slice %82 {offsets = [0, 192], sizes = [2, 64], strides = [1, 1]} : vector<2x256xf32> to vector<2x64xf32>
    %98 = arith.negf %97 : vector<2x64xf32>
    %99 = math.exp %98 : vector<2x64xf32>
    %cst_28 = arith.constant 1.000000e+00 : f32
    %100 = vector.broadcast %cst_28 : f32 to vector<2x64xf32>
    %101 = arith.addf %100, %99 : vector<2x64xf32>
    %102 = arith.divf %100, %101 : vector<2x64xf32>
    %103 = arith.mulf %94, %70 : vector<2x64xf32>
    %104 = arith.mulf %88, %96 : vector<2x64xf32>
    %105 = arith.addf %103, %104 : vector<2x64xf32>
    %106 = math.tanh %105 : vector<2x64xf32>
    %107 = arith.mulf %102, %106 : vector<2x64xf32>
    %108 = arith.index_cast %77 : i32 to index
    %c0_29 = arith.constant 0 : index
    %c0_30 = arith.constant 0 : index
    %109 = vector.load %arg3[%108, %c0_29, %c0_30] : memref<8x2x64xf32, #tpu.memory_space<vmem>>, vector<1x2x64xf32>
    %110 = vector.shape_cast %109 : vector<1x2x64xf32> to vector<2x64xf32>
    %111 = vector.shape_cast %107 : vector<2x64xf32> to vector<1x2x64xf32>
    tpu.vector_store %arg3[%108, %c0_29, %c0_30], %111 {strides = array<i32>} : memref<8x2x64xf32, #tpu.memory_space<vmem>>, vector<1x2x64xf32>,
    %c3_i32 = arith.constant 3 : i32
    %112 = arith.addi %6, %c3_i32 : i32
    %113 = arith.index_cast %112 : i32 to index
    %c0_31 = arith.constant 0 : index
    %c0_32 = arith.constant 0 : index
    %114 = vector.load %arg1[%113, %c0_31, %c0_32] : memref<8x2x256xf32, #tpu.memory_space<vmem>>, vector<1x2x256xf32>
    %115 = vector.shape_cast %114 : vector<1x2x256xf32> to vector<2x256xf32>
    %cst_33 = arith.constant dense<0.000000e+00> : vector<2x256xf32>
    %116 = tpu.matmul %107, %3, %cst_33 {dimension_numbers = #tpu.dot_dimension_numbers<[1], [0], [0], [1], [0, 0, 1, 1], [], []>} : vector<2x64xf32>, vector<64x256xf32>, vector<2x256xf32> -> vector<2x256xf32>
    %117 = arith.addf %115, %116 : vector<2x256xf32>
    %118 = vector.extract_strided_slice %117 {offsets = [0, 0], sizes = [2, 64], strides = [1, 1]} : vector<2x256xf32> to vector<2x64xf32>
    %119 = arith.negf %118 : vector<2x64xf32>
    %120 = math.exp %119 : vector<2x64xf32>
    %cst_34 = arith.constant 1.000000e+00 : f32
    %121 = vector.broadcast %cst_34 : f32 to vector<2x64xf32>
    %122 = arith.addf %121, %120 : vector<2x64xf32>
    %123 = arith.divf %121, %122 : vector<2x64xf32>
    %124 = vector.extract_strided_slice %117 {offsets = [0, 64], sizes = [2, 64], strides = [1, 1]} : vector<2x256xf32> to vector<2x64xf32>
    %125 = arith.negf %124 : vector<2x64xf32>
    %126 = math.exp %125 : vector<2x64xf32>
    %cst_35 = arith.constant 1.000000e+00 : f32
    %127 = vector.broadcast %cst_35 : f32 to vector<2x64xf32>
    %128 = arith.addf %127, %126 : vector<2x64xf32>
    %129 = arith.divf %127, %128 : vector<2x64xf32>
    %130 = vector.extract_strided_slice %117 {offsets = [0, 128], sizes = [2, 64], strides = [1, 1]} : vector<2x256xf32> to vector<2x64xf32>
    %131 = math.tanh %130 : vector<2x64xf32>
    %132 = vector.extract_strided_slice %117 {offsets = [0, 192], sizes = [2, 64], strides = [1, 1]} : vector<2x256xf32> to vector<2x64xf32>
    %133 = arith.negf %132 : vector<2x64xf32>
    %134 = math.exp %133 : vector<2x64xf32>
    %cst_36 = arith.constant 1.000000e+00 : f32
    %135 = vector.broadcast %cst_36 : f32 to vector<2x64xf32>
    %136 = arith.addf %135, %134 : vector<2x64xf32>
    %137 = arith.divf %135, %136 : vector<2x64xf32>
    %138 = arith.mulf %129, %105 : vector<2x64xf32>
    %139 = arith.mulf %123, %131 : vector<2x64xf32>
    %140 = arith.addf %138, %139 : vector<2x64xf32>
    %141 = math.tanh %140 : vector<2x64xf32>
    %142 = arith.mulf %137, %141 : vector<2x64xf32>
    %143 = arith.index_cast %112 : i32 to index
    %c0_37 = arith.constant 0 : index
    %c0_38 = arith.constant 0 : index
    %144 = vector.load %arg3[%143, %c0_37, %c0_38] : memref<8x2x64xf32, #tpu.memory_space<vmem>>, vector<1x2x64xf32>
    %145 = vector.shape_cast %144 : vector<1x2x64xf32> to vector<2x64xf32>
    %146 = vector.shape_cast %142 : vector<2x64xf32> to vector<1x2x64xf32>
    tpu.vector_store %arg3[%143, %c0_37, %c0_38], %146 {strides = array<i32>} : memref<8x2x64xf32, #tpu.memory_space<vmem>>, vector<1x2x64xf32>,
    %c4_i32 = arith.constant 4 : i32
    %147 = arith.addi %6, %c4_i32 : i32
    %148 = arith.index_cast %147 : i32 to index
    %c0_39 = arith.constant 0 : index
    %c0_40 = arith.constant 0 : index
    %149 = vector.load %arg1[%148, %c0_39, %c0_40] : memref<8x2x256xf32, #tpu.memory_space<vmem>>, vector<1x2x256xf32>
    %150 = vector.shape_cast %149 : vector<1x2x256xf32> to vector<2x256xf32>
    %cst_41 = arith.constant dense<0.000000e+00> : vector<2x256xf32>
    %151 = tpu.matmul %142, %3, %cst_41 {dimension_numbers = #tpu.dot_dimension_numbers<[1], [0], [0], [1], [0, 0, 1, 1], [], []>} : vector<2x64xf32>, vector<64x256xf32>, vector<2x256xf32> -> vector<2x256xf32>
    %152 = arith.addf %150, %151 : vector<2x256xf32>
    %153 = vector.extract_strided_slice %152 {offsets = [0, 0], sizes = [2, 64], strides = [1, 1]} : vector<2x256xf32> to vector<2x64xf32>
    %154 = arith.negf %153 : vector<2x64xf32>
    %155 = math.exp %154 : vector<2x64xf32>
    %cst_42 = arith.constant 1.000000e+00 : f32
    %156 = vector.broadcast %cst_42 : f32 to vector<2x64xf32>
    %157 = arith.addf %156, %155 : vector<2x64xf32>
    %158 = arith.divf %156, %157 : vector<2x64xf32>
    %159 = vector.extract_strided_slice %152 {offsets = [0, 64], sizes = [2, 64], strides = [1, 1]} : vector<2x256xf32> to vector<2x64xf32>
    %160 = arith.negf %159 : vector<2x64xf32>
    %161 = math.exp %160 : vector<2x64xf32>
    %cst_43 = arith.constant 1.000000e+00 : f32
    %162 = vector.broadcast %cst_43 : f32 to vector<2x64xf32>
    %163 = arith.addf %162, %161 : vector<2x64xf32>
    %164 = arith.divf %162, %163 : vector<2x64xf32>
    %165 = vector.extract_strided_slice %152 {offsets = [0, 128], sizes = [2, 64], strides = [1, 1]} : vector<2x256xf32> to vector<2x64xf32>
    %166 = math.tanh %165 : vector<2x64xf32>
    %167 = vector.extract_strided_slice %152 {offsets = [0, 192], sizes = [2, 64], strides = [1, 1]} : vector<2x256xf32> to vector<2x64xf32>
    %168 = arith.negf %167 : vector<2x64xf32>
    %169 = math.exp %168 : vector<2x64xf32>
    %cst_44 = arith.constant 1.000000e+00 : f32
    %170 = vector.broadcast %cst_44 : f32 to vector<2x64xf32>
    %171 = arith.addf %170, %169 : vector<2x64xf32>
    %172 = arith.divf %170, %171 : vector<2x64xf32>
    %173 = arith.mulf %164, %140 : vector<2x64xf32>
    %174 = arith.mulf %158, %166 : vector<2x64xf32>
    %175 = arith.addf %173, %174 : vector<2x64xf32>
    %176 = math.tanh %175 : vector<2x64xf32>
    %177 = arith.mulf %172, %176 : vector<2x64xf32>
    %178 = arith.index_cast %147 : i32 to index
    %c0_45 = arith.constant 0 : index
    %c0_46 = arith.constant 0 : index
    %179 = vector.load %arg3[%178, %c0_45, %c0_46] : memref<8x2x64xf32, #tpu.memory_space<vmem>>, vector<1x2x64xf32>
    %180 = vector.shape_cast %179 : vector<1x2x64xf32> to vector<2x64xf32>
    %181 = vector.shape_cast %177 : vector<2x64xf32> to vector<1x2x64xf32>
    tpu.vector_store %arg3[%178, %c0_45, %c0_46], %181 {strides = array<i32>} : memref<8x2x64xf32, #tpu.memory_space<vmem>>, vector<1x2x64xf32>,
    %c5_i32 = arith.constant 5 : i32
    %182 = arith.addi %6, %c5_i32 : i32
    %183 = arith.index_cast %182 : i32 to index
    %c0_47 = arith.constant 0 : index
    %c0_48 = arith.constant 0 : index
    %184 = vector.load %arg1[%183, %c0_47, %c0_48] : memref<8x2x256xf32, #tpu.memory_space<vmem>>, vector<1x2x256xf32>
    %185 = vector.shape_cast %184 : vector<1x2x256xf32> to vector<2x256xf32>
    %cst_49 = arith.constant dense<0.000000e+00> : vector<2x256xf32>
    %186 = tpu.matmul %177, %3, %cst_49 {dimension_numbers = #tpu.dot_dimension_numbers<[1], [0], [0], [1], [0, 0, 1, 1], [], []>} : vector<2x64xf32>, vector<64x256xf32>, vector<2x256xf32> -> vector<2x256xf32>
    %187 = arith.addf %185, %186 : vector<2x256xf32>
    %188 = vector.extract_strided_slice %187 {offsets = [0, 0], sizes = [2, 64], strides = [1, 1]} : vector<2x256xf32> to vector<2x64xf32>
    %189 = arith.negf %188 : vector<2x64xf32>
    %190 = math.exp %189 : vector<2x64xf32>
    %cst_50 = arith.constant 1.000000e+00 : f32
    %191 = vector.broadcast %cst_50 : f32 to vector<2x64xf32>
    %192 = arith.addf %191, %190 : vector<2x64xf32>
    %193 = arith.divf %191, %192 : vector<2x64xf32>
    %194 = vector.extract_strided_slice %187 {offsets = [0, 64], sizes = [2, 64], strides = [1, 1]} : vector<2x256xf32> to vector<2x64xf32>
    %195 = arith.negf %194 : vector<2x64xf32>
    %196 = math.exp %195 : vector<2x64xf32>
    %cst_51 = arith.constant 1.000000e+00 : f32
    %197 = vector.broadcast %cst_51 : f32 to vector<2x64xf32>
    %198 = arith.addf %197, %196 : vector<2x64xf32>
    %199 = arith.divf %197, %198 : vector<2x64xf32>
    %200 = vector.extract_strided_slice %187 {offsets = [0, 128], sizes = [2, 64], strides = [1, 1]} : vector<2x256xf32> to vector<2x64xf32>
    %201 = math.tanh %200 : vector<2x64xf32>
    %202 = vector.extract_strided_slice %187 {offsets = [0, 192], sizes = [2, 64], strides = [1, 1]} : vector<2x256xf32> to vector<2x64xf32>
    %203 = arith.negf %202 : vector<2x64xf32>
    %204 = math.exp %203 : vector<2x64xf32>
    %cst_52 = arith.constant 1.000000e+00 : f32
    %205 = vector.broadcast %cst_52 : f32 to vector<2x64xf32>
    %206 = arith.addf %205, %204 : vector<2x64xf32>
    %207 = arith.divf %205, %206 : vector<2x64xf32>
    %208 = arith.mulf %199, %175 : vector<2x64xf32>
    %209 = arith.mulf %193, %201 : vector<2x64xf32>
    %210 = arith.addf %208, %209 : vector<2x64xf32>
    %211 = math.tanh %210 : vector<2x64xf32>
    %212 = arith.mulf %207, %211 : vector<2x64xf32>
    %213 = arith.index_cast %182 : i32 to index
    %c0_53 = arith.constant 0 : index
    %c0_54 = arith.constant 0 : index
    %214 = vector.load %arg3[%213, %c0_53, %c0_54] : memref<8x2x64xf32, #tpu.memory_space<vmem>>, vector<1x2x64xf32>
    %215 = vector.shape_cast %214 : vector<1x2x64xf32> to vector<2x64xf32>
    %216 = vector.shape_cast %212 : vector<2x64xf32> to vector<1x2x64xf32>
    tpu.vector_store %arg3[%213, %c0_53, %c0_54], %216 {strides = array<i32>} : memref<8x2x64xf32, #tpu.memory_space<vmem>>, vector<1x2x64xf32>,
    %c6_i32 = arith.constant 6 : i32
    %217 = arith.addi %6, %c6_i32 : i32
    %218 = arith.index_cast %217 : i32 to index
    %c0_55 = arith.constant 0 : index
    %c0_56 = arith.constant 0 : index
    %219 = vector.load %arg1[%218, %c0_55, %c0_56] : memref<8x2x256xf32, #tpu.memory_space<vmem>>, vector<1x2x256xf32>
    %220 = vector.shape_cast %219 : vector<1x2x256xf32> to vector<2x256xf32>
    %cst_57 = arith.constant dense<0.000000e+00> : vector<2x256xf32>
    %221 = tpu.matmul %212, %3, %cst_57 {dimension_numbers = #tpu.dot_dimension_numbers<[1], [0], [0], [1], [0, 0, 1, 1], [], []>} : vector<2x64xf32>, vector<64x256xf32>, vector<2x256xf32> -> vector<2x256xf32>
    %222 = arith.addf %220, %221 : vector<2x256xf32>
    %223 = vector.extract_strided_slice %222 {offsets = [0, 0], sizes = [2, 64], strides = [1, 1]} : vector<2x256xf32> to vector<2x64xf32>
    %224 = arith.negf %223 : vector<2x64xf32>
    %225 = math.exp %224 : vector<2x64xf32>
    %cst_58 = arith.constant 1.000000e+00 : f32
    %226 = vector.broadcast %cst_58 : f32 to vector<2x64xf32>
    %227 = arith.addf %226, %225 : vector<2x64xf32>
    %228 = arith.divf %226, %227 : vector<2x64xf32>
    %229 = vector.extract_strided_slice %222 {offsets = [0, 64], sizes = [2, 64], strides = [1, 1]} : vector<2x256xf32> to vector<2x64xf32>
    %230 = arith.negf %229 : vector<2x64xf32>
    %231 = math.exp %230 : vector<2x64xf32>
    %cst_59 = arith.constant 1.000000e+00 : f32
    %232 = vector.broadcast %cst_59 : f32 to vector<2x64xf32>
    %233 = arith.addf %232, %231 : vector<2x64xf32>
    %234 = arith.divf %232, %233 : vector<2x64xf32>
    %235 = vector.extract_strided_slice %222 {offsets = [0, 128], sizes = [2, 64], strides = [1, 1]} : vector<2x256xf32> to vector<2x64xf32>
    %236 = math.tanh %235 : vector<2x64xf32>
    %237 = vector.extract_strided_slice %222 {offsets = [0, 192], sizes = [2, 64], strides = [1, 1]} : vector<2x256xf32> to vector<2x64xf32>
    %238 = arith.negf %237 : vector<2x64xf32>
    %239 = math.exp %238 : vector<2x64xf32>
    %cst_60 = arith.constant 1.000000e+00 : f32
    %240 = vector.broadcast %cst_60 : f32 to vector<2x64xf32>
    %241 = arith.addf %240, %239 : vector<2x64xf32>
    %242 = arith.divf %240, %241 : vector<2x64xf32>
    %243 = arith.mulf %234, %210 : vector<2x64xf32>
    %244 = arith.mulf %228, %236 : vector<2x64xf32>
    %245 = arith.addf %243, %244 : vector<2x64xf32>
    %246 = math.tanh %245 : vector<2x64xf32>
    %247 = arith.mulf %242, %246 : vector<2x64xf32>
    %248 = arith.index_cast %217 : i32 to index
    %c0_61 = arith.constant 0 : index
    %c0_62 = arith.constant 0 : index
    %249 = vector.load %arg3[%248, %c0_61, %c0_62] : memref<8x2x64xf32, #tpu.memory_space<vmem>>, vector<1x2x64xf32>
    %250 = vector.shape_cast %249 : vector<1x2x64xf32> to vector<2x64xf32>
    %251 = vector.shape_cast %247 : vector<2x64xf32> to vector<1x2x64xf32>
    tpu.vector_store %arg3[%248, %c0_61, %c0_62], %251 {strides = array<i32>} : memref<8x2x64xf32, #tpu.memory_space<vmem>>, vector<1x2x64xf32>,
    %c7_i32 = arith.constant 7 : i32
    %252 = arith.addi %6, %c7_i32 : i32
    %253 = arith.index_cast %252 : i32 to index
    %c0_63 = arith.constant 0 : index
    %c0_64 = arith.constant 0 : index
    %254 = vector.load %arg1[%253, %c0_63, %c0_64] : memref<8x2x256xf32, #tpu.memory_space<vmem>>, vector<1x2x256xf32>
    %255 = vector.shape_cast %254 : vector<1x2x256xf32> to vector<2x256xf32>
    %cst_65 = arith.constant dense<0.000000e+00> : vector<2x256xf32>
    %256 = tpu.matmul %247, %3, %cst_65 {dimension_numbers = #tpu.dot_dimension_numbers<[1], [0], [0], [1], [0, 0, 1, 1], [], []>} : vector<2x64xf32>, vector<64x256xf32>, vector<2x256xf32> -> vector<2x256xf32>
    %257 = arith.addf %255, %256 : vector<2x256xf32>
    %258 = vector.extract_strided_slice %257 {offsets = [0, 0], sizes = [2, 64], strides = [1, 1]} : vector<2x256xf32> to vector<2x64xf32>
    %259 = arith.negf %258 : vector<2x64xf32>
    %260 = math.exp %259 : vector<2x64xf32>
    %cst_66 = arith.constant 1.000000e+00 : f32
    %261 = vector.broadcast %cst_66 : f32 to vector<2x64xf32>
    %262 = arith.addf %261, %260 : vector<2x64xf32>
    %263 = arith.divf %261, %262 : vector<2x64xf32>
    %264 = vector.extract_strided_slice %257 {offsets = [0, 64], sizes = [2, 64], strides = [1, 1]} : vector<2x256xf32> to vector<2x64xf32>
    %265 = arith.negf %264 : vector<2x64xf32>
    %266 = math.exp %265 : vector<2x64xf32>
    %cst_67 = arith.constant 1.000000e+00 : f32
    %267 = vector.broadcast %cst_67 : f32 to vector<2x64xf32>
    %268 = arith.addf %267, %266 : vector<2x64xf32>
    %269 = arith.divf %267, %268 : vector<2x64xf32>
    %270 = vector.extract_strided_slice %257 {offsets = [0, 128], sizes = [2, 64], strides = [1, 1]} : vector<2x256xf32> to vector<2x64xf32>
    %271 = math.tanh %270 : vector<2x64xf32>
    %272 = vector.extract_strided_slice %257 {offsets = [0, 192], sizes = [2, 64], strides = [1, 1]} : vector<2x256xf32> to vector<2x64xf32>
    %273 = arith.negf %272 : vector<2x64xf32>
    %274 = math.exp %273 : vector<2x64xf32>
    %cst_68 = arith.constant 1.000000e+00 : f32
    %275 = vector.broadcast %cst_68 : f32 to vector<2x64xf32>
    %276 = arith.addf %275, %274 : vector<2x64xf32>
    %277 = arith.divf %275, %276 : vector<2x64xf32>
    %278 = arith.mulf %269, %245 : vector<2x64xf32>
    %279 = arith.mulf %263, %271 : vector<2x64xf32>
    %280 = arith.addf %278, %279 : vector<2x64xf32>
    %281 = math.tanh %280 : vector<2x64xf32>
    %282 = arith.mulf %277, %281 : vector<2x64xf32>
    %283 = arith.index_cast %252 : i32 to index
    %c0_69 = arith.constant 0 : index
    %c0_70 = arith.constant 0 : index
    %284 = vector.load %arg3[%283, %c0_69, %c0_70] : memref<8x2x64xf32, #tpu.memory_space<vmem>>, vector<1x2x64xf32>
    %285 = vector.shape_cast %284 : vector<1x2x64xf32> to vector<2x64xf32>
    %286 = vector.shape_cast %282 : vector<2x64xf32> to vector<1x2x64xf32>
    tpu.vector_store %arg3[%283, %c0_69, %c0_70], %286 {strides = array<i32>} : memref<8x2x64xf32, #tpu.memory_space<vmem>>, vector<1x2x64xf32>,
    %c1_i32_71 = arith.constant 1 : i32
    %c0_72 = arith.constant 0 : index
    %c0_73 = arith.constant 0 : index
    %287 = vector.load %arg4[%c0_72, %c0_73] : memref<2x64xf32, #tpu.memory_space<vmem>>, vector<2x64xf32>
    tpu.vector_store %arg4[%c0_72, %c0_73], %282 {strides = array<i32>} : memref<2x64xf32, #tpu.memory_space<vmem>>, vector<2x64xf32>,
    %c0_74 = arith.constant 0 : index
    %c0_75 = arith.constant 0 : index
    %288 = vector.load %arg5[%c0_74, %c0_75] : memref<2x64xf32, #tpu.memory_space<vmem>>, vector<2x64xf32>
    tpu.vector_store %arg5[%c0_74, %c0_75], %280 {strides = array<i32>} : memref<2x64xf32, #tpu.memory_space<vmem>>, vector<2x64xf32>,
    return
  }
  func.func @transform_0(%arg0: i32) -> (i32, i32, i32) {
    %c0_i32 = arith.constant 0 : i32
    %c0_i32_0 = arith.constant 0 : i32
    %c0_i32_1 = arith.constant 0 : i32
    return %arg0, %c0_i32, %c0_i32_0 : i32, i32, i32
  }
  func.func @transform_1(%arg0: i32) -> (i32, i32) {
    %c0_i32 = arith.constant 0 : i32
    %c0_i32_0 = arith.constant 0 : i32
    %c0_i32_1 = arith.constant 0 : i32
    return %c0_i32, %c0_i32_0 : i32, i32
  }
  func.func @transform_2(%arg0: i32) -> (i32, i32, i32) {
    %c0_i32 = arith.constant 0 : i32
    %c0_i32_0 = arith.constant 0 : i32
    %c0_i32_1 = arith.constant 0 : i32
    return %arg0, %c0_i32, %c0_i32_0 : i32, i32, i32
  }
}

</mosaic_0001>

<llo_original>
// kernel: tpu_custom_call.1
$region0: #{tpu_custom_call.1}
  #allocation0 [shape = 'u32[]', space=smem, size = 0x4, offset = 0x4, fixed_abs, tag = 'smem constant byte address 0x4 - core index']
  #allocation1 [shape = 'u32[144,128]{1,0:T(1,128)}', space=vmem, size = 0x12000, scoped, tag = 'internal scratch']
  #allocation2 [shape = 'f32[2,64]{1,0:T(2,128)}', space=vmem, size = 0x400, scoped, tag = 'scratch operand']
  #allocation3 [shape = 'f32[2,64]{1,0:T(2,128)}', space=vmem, size = 0x400, scoped, tag = 'scratch operand']
  %s0 = inlined_call_operand.hbm [shape: f32[8,2,256], index: 0, kind: input, shape index: {}]
  %s1 = inlined_call_operand.hbm [shape: f32[64,256], index: 1, kind: input, shape index: {}]
  %s2 = inlined_call_operand.hbm [shape: f32[8,2,64], index: 2, kind: output, shape index: {}]
  %s3 = sld [smem:[#allocation0]]
  $region30: #{tpu_custom_call.1} parent=0
    _
  %s5 = ssub.s32 1, %s3
  %s6 = scalar_select 0, %s5, %s3
  $region1: #{tpu_custom_call.1} parent=0
    #allocation4 [shape = 'u8[16384]{0}', space=vmem, size = 0x4000, scoped, tag = 'input window, operand 0, single buffered']
    #allocation5 [shape = 's32[1]{0}', space=sflag, size = 0x4, scoped, tag = 'scoped memory for tpu_custom_call.1']
    #allocation6 [shape = 's32[1]{0}', space=sflag, size = 0x4, scoped, tag = 'scoped memory for tpu_custom_call.1']
    #allocation7 [shape = 'u8[65536]{0}', space=vmem, size = 0x10000, scoped, tag = 'input window, operand 1, single buffered']
    #allocation8 [shape = 's32[1]{0}', space=sflag, size = 0x4, scoped, tag = 'scoped memory for tpu_custom_call.1']
    #allocation9 [shape = 'u8[8192]{0}', space=vmem, size = 0x2000, scoped, tag = 'output window, operand 0, single buffered']
    %7 = vsyncpa [#allocation5], 0
    %8 = vsyncpa [#allocation8], 0
    %9 = vsyncpa [#allocation6], 0
    // Predicated region
    $region2: #{tpu_custom_call.1} parent=1 // pred_check
      _
    $region3: #{tpu_custom_call.1} parent=1 // pred_check_branch
      %11 = sbr.rel (0) target = $region5
    $region4: #{tpu_custom_call.1} parent=1 // pred_region
      %s13 = ssub.s32 512, 512
      %14 = vsyncadd [#allocation5], %s13
      %s15 = sshll.u32 [#allocation4], 4
      %s16 = int_to_ptr.vmem [resolvable:$true] %s15
      %21 = dma.hbm_to_vmem [thread:$0]  %s0, 512, %s16, [#allocation5], 64, 64, 4
    $region5: #{tpu_custom_call.1} parent=1 // pred_fallthru
      _
    // Predicated region
    $region6: #{tpu_custom_call.1} parent=1 // pred_check
      _
    $region7: #{tpu_custom_call.1} parent=1 // pred_check_branch
      %23 = sbr.rel (0) target = $region9
    $region8: #{tpu_custom_call.1} parent=1 // pred_region
      %s25 = ssub.s32 2048, 2048
      %26 = vsyncadd [#allocation8], %s25
      %s27 = sshll.u32 [#allocation7], 4
      %s28 = int_to_ptr.vmem [resolvable:$true] %s27
      %33 = dma.hbm_to_vmem [thread:$0]  %s1, 2048, %s28, [#allocation8], 256, 256, 16
    $region9: #{tpu_custom_call.1} parent=1 // pred_fallthru
      _
    // Predicated region
    $region10: #{tpu_custom_call.1} parent=1 // pred_check
      _
    $region11: #{tpu_custom_call.1} parent=1 // pred_check_branch
      %35 = sbr.rel (0) target = $region13
    $region12: #{tpu_custom_call.1} parent=1 // pred_region
      %36 = dma.done [#allocation5], 512
    $region13: #{tpu_custom_call.1} parent=1 // pred_fallthru
      _
    // Predicated region
    $region14: #{tpu_custom_call.1} parent=1 // pred_check
      _
    $region15: #{tpu_custom_call.1} parent=1 // pred_check_branch
      %38 = sbr.rel (0) target = $region17
    $region16: #{tpu_custom_call.1} parent=1 // pred_region
      %39 = dma.done [#allocation8], 2048
    $region17: #{tpu_custom_call.1} parent=1 // pred_fallthru
      _
    %p40 = scmp.eq.s32.totalorder 0, 0
    // Predicated region
    $region18: #{tpu_custom_call.1} parent=1 // pred_check
      %p41 = pneg %p40
    $region19: #{tpu_custom_call.1} parent=1 // pred_check_branch
      %43 = sbr.rel (%p41) target = $region21
    $region20: #{tpu_custom_call.1} parent=1 // pred_region
      %vm44 = vcmask 517120
      %45 = vst.msk [vmem:[#allocation2] sm:$0x3] %vm44, 0.0
      %46 = vst.msk [vmem:[#allocation3] sm:$0x3] %vm44, 0.0
    $region21: #{tpu_custom_call.1} parent=1 // pred_fallthru
      _
    %v47 = vld [vmem:[#allocation7] sm:$0xff]
    %v48 = vld [vmem:[#allocation7 + $0x8] sm:$0xff]
    %v49 = vld [vmem:[#allocation7 + $0x10] sm:$0xff]
    %v50 = vld [vmem:[#allocation7 + $0x18] sm:$0xff]
    %v51 = vld [vmem:[#allocation7 + $0x20] sm:$0xff]
    %v52 = vld [vmem:[#allocation7 + $0x28] sm:$0xff]
    %v53 = vld [vmem:[#allocation7 + $0x30] sm:$0xff]
    %v54 = vld [vmem:[#allocation7 + $0x38] sm:$0xff]
    %v55 = vld [vmem:[#allocation7 + $0x40] sm:$0xff]
    %v56 = vld [vmem:[#allocation7 + $0x48] sm:$0xff]
    %v57 = vld [vmem:[#allocation7 + $0x50] sm:$0xff]
    %v58 = vld [vmem:[#allocation7 + $0x58] sm:$0xff]
    %v59 = vld [vmem:[#allocation7 + $0x60] sm:$0xff]
    %v60 = vld [vmem:[#allocation7 + $0x68] sm:$0xff]
    %v61 = vld [vmem:[#allocation7 + $0x70] sm:$0xff]
    %v62 = vld [vmem:[#allocation7 + $0x78] sm:$0xff]
    %v63 = vld [vmem:[#allocation2] sm:$0x3]
    %v64 = vld [vmem:[#allocation3] sm:$0x3]
    %v65 = vld [vmem:[#allocation4] sm:$0xf]
    %vm66 = vcmask 523264
    %v68 = vsel %vm66, %v63, 0
    %70 = vmatprep.subr.mxu0 %v48
    %71 = vmatpush1.msra.mxu0 %v47
    %72 = vmatprep.subr.mxu0 %v50
    %73 = vmatpush1.msra.mxu0 %v49
    %74 = vmatprep.subr.mxu0 %v52
    %75 = vmatpush1.msra.mxu0 %v51
    %76 = vmatprep.subr.mxu0 %v54
    %77 = vmatpush1.msra.mxu0 %v53
    %78 = vmatprep.subr.mxu0 %v56
    %79 = vmatpush1.msra.mxu0 %v55
    %80 = vmatprep.subr.mxu0 %v58
    %81 = vmatpush1.msra.mxu0 %v57
    %82 = vmatprep.subr.mxu0 %v60
    %83 = vmatpush1.msra.mxu0 %v59
    %84 = vmatprep.subr.mxu0 %v62
    %85 = vmatpush1.msra.mxu0 %v61
    %86 = vmatprep.subr.mxu0 0.0
    %87 = vmatpush1.msra.mxu0 0.0
    %88 = vmatprep.subr.mxu0 0.0
    %89 = vmatpush1.msra.mxu0 0.0
    %90 = vmatprep.subr.mxu0 0.0
    %91 = vmatpush1.msra.mxu0 0.0
    %92 = vmatprep.subr.mxu0 0.0
    %93 = vmatpush1.msra.mxu0 0.0
    %94 = vmatprep.subr.mxu0 0.0
    %95 = vmatpush1.msra.mxu0 0.0
    %96 = vmatprep.subr.mxu0 0.0
    %97 = vmatpush1.msra.mxu0 0.0
    %98 = vmatprep.subr.mxu0 0.0
    %99 = vmatpush1.msra.mxu0 0.0
    %100 = vmatprep.subr.mxu0 0.0
    %101 = vmatpush1.msra.mxu0 0.0
    %102 = vmatprep.subr.mxu0 0.0
    %103 = vmatpush1.msra.mxu0 0.0
    %104 = vmatprep.subr.mxu0 0.0
    %105 = vmatpush1.msra.mxu0 0.0
    %106 = vmatprep.subr.mxu0 0.0
    %107 = vmatpush1.msra.mxu0 0.0
    %108 = vmatprep.subr.mxu0 0.0
    %109 = vmatpush1.msra.mxu0 0.0
    %110 = vmatprep.subr.mxu0 0.0
    %111 = vmatpush1.msra.mxu0 0.0
    %112 = vmatprep.subr.mxu0 0.0
    %113 = vmatpush1.msra.mxu0 0.0
    %114 = vmatprep.subr.mxu0 0.0
    %115 = vmatpush1.msra.mxu0 0.0
    %116 = vmatprep.subr.mxu0 0.0
    %117 = vmatpush1.msra.mxu0 0.0
    %118 = vmatprep.subr.mxu0 0.0
    %119 = vmatpush1.msra.mxu0 0.0
    %120 = vmatprep.subr.mxu0 0.0
    %121 = vmatpush1.msra.mxu0 0.0
    %122 = vmatprep.subr.mxu0 0.0
    %123 = vmatpush1.msra.mxu0 0.0
    %124 = vmatprep.subr.mxu0 0.0
    %125 = vmatpush1.msra.mxu0 0.0
    %126 = vmatprep.subr.mxu0 0.0
    %127 = vmatpush1.msra.mxu0 0.0
    %128 = vmatprep.subr.mxu0 0.0
    %129 = vmatpush1.msra.mxu0 0.0
    %130 = vmatprep.subr.mxu0 0.0
    %131 = vmatpush1.msra.mxu0 0.0
    %132 = vmatprep.subr.mxu0 0.0
    %133 = vmatpush1.msra.mxu0 0.0
    %134 = vmatprep.mubr.f32.mxu0 0.0
    %135 = vmatmul.mubr.f32.gmra.mrb[0].mxu0 %v68
    %v136 = vpop.f32.mrb[0].mxu0
    %v137 = vadd.f32 0.0, %v136
    %v138 = vpop.f32.mrb[0].mxu0
    %v139 = vadd.f32 0.0, %v138
    %140 = vdwg.mxu0
    %v143 = vcombine.low %v137, %v139
    %v145 = vunpack.c.l.s4 1983009808
    %v146 = vunpack.c.0.s8 %v145
    %v147 = vlaneseq
    %v148 = vshrl.u32 %v147, 7
    %v149 = vsub.s32 %v146, %v148
    %v150 = vrot.slane %v143, %v149
    %v152 = vadd.f32 %v65, %v150
    %v153 = vxor.u32 %v152, 2147483648
    %v154 = vmul.f32 %v153, 1.442695
    %v155 = vpow.pop %v154
    %v156 = vadd.f32 %v155, 1.0
    %v157 = vrcp.pop %v156
    %v158 = vmul.f32 1.0, %v157
    %v160 = vrot.slane %v152, 2
    %v162 = vtanh.pop %v160
    %163 = vrot.lane.b32.xlu0 %v152, 64
    %v164 = vpop.permute.xlu0 %163
    %v165 = vrot.slane %v164, 2
    %v167 = vxor.u32 %v165, 2147483648
    %v168 = vmul.f32 %v167, 1.442695
    %v169 = vpow.pop %v168
    %v170 = vadd.f32 %v169, 1.0
    %v171 = vrcp.pop %v170
    %v172 = vmul.f32 1.0, %v171
    %v175 = vunpack.c.l.s4 1983009808
    %v176 = vunpack.c.0.s8 %v175
    %v177 = vlaneseq
    %v178 = vshrl.u32 %v177, 7
    %v179 = vsub.s32 %v176, %v178
    %v180 = vrot.slane %v64, %v179
    %181 = vrot.lane.b32.xlu0 %v180, 64
    %v182 = vpop.permute.xlu0 %181
    %v184 = vmul.f32 %v158, %v182
    %v185 = vmul.f32 %v158, %v162
    %187 = vrot.lane.b32.xlu0 %v185, 64
    %v188 = vpop.permute.xlu0 %187
    %v190 = vadd.f32 %v184, %v188
    %v191 = vtanh.pop %v190
    %193 = vrot.lane.b32.xlu0 %v191, 64
    %v194 = vpop.permute.xlu0 %193
    %v196 = vmul.f32 %v172, %v194
    %vm197 = vcmask 517120
    %198 = vst.msk [vmem:[#allocation9] sm:$0x3] %vm197, %v196
    %s199 = scalar_lea.vmem [#allocation4], 4
    %v200 = vld [vmem:[%s199] sm:$0xf]
    %v202 = vsel %vm66, %v196, 0
    %204 = vmatprep.subr.mxu0 %v48
    %205 = vmatpush1.msra.mxu0 %v47
    %206 = vmatprep.subr.mxu0 %v50
    %207 = vmatpush1.msra.mxu0 %v49
    %208 = vmatprep.subr.mxu0 %v52
    %209 = vmatpush1.msra.mxu0 %v51
    %210 = vmatprep.subr.mxu0 %v54
    %211 = vmatpush1.msra.mxu0 %v53
    %212 = vmatprep.subr.mxu0 %v56
    %213 = vmatpush1.msra.mxu0 %v55
    %214 = vmatprep.subr.mxu0 %v58
    %215 = vmatpush1.msra.mxu0 %v57
    %216 = vmatprep.subr.mxu0 %v60
    %217 = vmatpush1.msra.mxu0 %v59
    %218 = vmatprep.subr.mxu0 %v62
    %219 = vmatpush1.msra.mxu0 %v61
    %220 = vmatprep.subr.mxu0 0.0
    %221 = vmatpush1.msra.mxu0 0.0
    %222 = vmatprep.subr.mxu0 0.0
    %223 = vmatpush1.msra.mxu0 0.0
    %224 = vmatprep.subr.mxu0 0.0
    %225 = vmatpush1.msra.mxu0 0.0
    %226 = vmatprep.subr.mxu0 0.0
    %227 = vmatpush1.msra.mxu0 0.0
    %228 = vmatprep.subr.mxu0 0.0
    %229 = vmatpush1.msra.mxu0 0.0
    %230 = vmatprep.subr.mxu0 0.0
    %231 = vmatpush1.msra.mxu0 0.0
    %232 = vmatprep.subr.mxu0 0.0
    %233 = vmatpush1.msra.mxu0 0.0
    %234 = vmatprep.subr.mxu0 0.0
    %235 = vmatpush1.msra.mxu0 0.0
    %236 = vmatprep.subr.mxu0 0.0
    %237 = vmatpush1.msra.mxu0 0.0
    %238 = vmatprep.subr.mxu0 0.0
    %239 = vmatpush1.msra.mxu0 0.0
    %240 = vmatprep.subr.mxu0 0.0
    %241 = vmatpush1.msra.mxu0 0.0
    %242 = vmatprep.subr.mxu0 0.0
    %243 = vmatpush1.msra.mxu0 0.0
    %244 = vmatprep.subr.mxu0 0.0
    %245 = vmatpush1.msra.mxu0 0.0
    %246 = vmatprep.subr.mxu0 0.0
    %247 = vmatpush1.msra.mxu0 0.0
    %248 = vmatprep.subr.mxu0 0.0
    %249 = vmatpush1.msra.mxu0 0.0
    %250 = vmatprep.subr.mxu0 0.0
    %251 = vmatpush1.msra.mxu0 0.0
    %252 = vmatprep.subr.mxu0 0.0
    %253 = vmatpush1.msra.mxu0 0.0
    %254 = vmatprep.subr.mxu0 0.0
    %255 = vmatpush1.msra.mxu0 0.0
    %256 = vmatprep.subr.mxu0 0.0
    %257 = vmatpush1.msra.mxu0 0.0
    %258 = vmatprep.subr.mxu0 0.0
    %259 = vmatpush1.msra.mxu0 0.0
    %260 = vmatprep.subr.mxu0 0.0
    %261 = vmatpush1.msra.mxu0 0.0
    %262 = vmatprep.subr.mxu0 0.0
    %263 = vmatpush1.msra.mxu0 0.0
    %264 = vmatprep.subr.mxu0 0.0
    %265 = vmatpush1.msra.mxu0 0.0
    %266 = vmatprep.subr.mxu0 0.0
    %267 = vmatpush1.msra.mxu0 0.0
    %268 = vmatprep.mubr.f32.mxu0 0.0
    %269 = vmatmul.mubr.f32.gmra.mrb[0].mxu0 %v202
    %v270 = vpop.f32.mrb[0].mxu0
    %v271 = vadd.f32 0.0, %v270
    %v272 = vpop.f32.mrb[0].mxu0
    %v273 = vadd.f32 0.0, %v272
    %274 = vdwg.mxu0
    %v277 = vcombine.low %v271, %v273
    %v279 = vunpack.c.l.s4 1983009808
    %v280 = vunpack.c.0.s8 %v279
    %v281 = vlaneseq
    %v282 = vshrl.u32 %v281, 7
    %v283 = vsub.s32 %v280, %v282
    %v284 = vrot.slane %v277, %v283
    %v286 = vadd.f32 %v200, %v284
    %v287 = vxor.u32 %v286, 2147483648
    %v288 = vmul.f32 %v287, 1.442695
    %v289 = vpow.pop %v288
    %v290 = vadd.f32 %v289, 1.0
    %v291 = vrcp.pop %v290
    %v292 = vmul.f32 1.0, %v291
    %v294 = vrot.slane %v286, 2
    %v296 = vtanh.pop %v294
    %297 = vrot.lane.b32.xlu0 %v286, 64
    %v298 = vpop.permute.xlu0 %297
    %v299 = vrot.slane %v298, 2
    %v301 = vxor.u32 %v299, 2147483648
    %v302 = vmul.f32 %v301, 1.442695
    %v303 = vpow.pop %v302
    %v304 = vadd.f32 %v303, 1.0
    %v305 = vrcp.pop %v304
    %v306 = vmul.f32 1.0, %v305
    %v307 = vmul.f32 %v292, %v190
    %v308 = vmul.f32 %v292, %v296
    %310 = vrot.lane.b32.xlu0 %v308, 64
    %v311 = vpop.permute.xlu0 %310
    %v313 = vadd.f32 %v307, %v311
    %v314 = vtanh.pop %v313
    %316 = vrot.lane.b32.xlu0 %v314, 64
    %v317 = vpop.permute.xlu0 %316
    %v319 = vmul.f32 %v306, %v317
    %s320 = scalar_lea.vmem [#allocation9], 2
    %321 = vst.msk [vmem:[%s320] sm:$0x3] %vm197, %v319
    %s322 = scalar_lea.vmem [#allocation4], 8
    %v323 = vld [vmem:[%s322] sm:$0xf]
    %v325 = vsel %vm66, %v319, 0
    %327 = vmatprep.subr.mxu0 %v48
    %328 = vmatpush1.msra.mxu0 %v47
    %329 = vmatprep.subr.mxu0 %v50
    %330 = vmatpush1.msra.mxu0 %v49
    %331 = vmatprep.subr.mxu0 %v52
    %332 = vmatpush1.msra.mxu0 %v51
    %333 = vmatprep.subr.mxu0 %v54
    %334 = vmatpush1.msra.mxu0 %v53
    %335 = vmatprep.subr.mxu0 %v56
    %336 = vmatpush1.msra.mxu0 %v55
    %337 = vmatprep.subr.mxu0 %v58
    %338 = vmatpush1.msra.mxu0 %v57
    %339 = vmatprep.subr.mxu0 %v60
    %340 = vmatpush1.msra.mxu0 %v59
    %341 = vmatprep.subr.mxu0 %v62
    %342 = vmatpush1.msra.mxu0 %v61
    %343 = vmatprep.subr.mxu0 0.0
    %344 = vmatpush1.msra.mxu0 0.0
    %345 = vmatprep.subr.mxu0 0.0
    %346 = vmatpush1.msra.mxu0 0.0
    %347 = vmatprep.subr.mxu0 0.0
    %348 = vmatpush1.msra.mxu0 0.0
    %349 = vmatprep.subr.mxu0 0.0
    %350 = vmatpush1.msra.mxu0 0.0
    %351 = vmatprep.subr.mxu0 0.0
    %352 = vmatpush1.msra.mxu0 0.0
    %353 = vmatprep.subr.mxu0 0.0
    %354 = vmatpush1.msra.mxu0 0.0
    %355 = vmatprep.subr.mxu0 0.0
    %356 = vmatpush1.msra.mxu0 0.0
    %357 = vmatprep.subr.mxu0 0.0
    %358 = vmatpush1.msra.mxu0 0.0
    %359 = vmatprep.subr.mxu0 0.0
    %360 = vmatpush1.msra.mxu0 0.0
    %361 = vmatprep.subr.mxu0 0.0
    %362 = vmatpush1.msra.mxu0 0.0
    %363 = vmatprep.subr.mxu0 0.0
    %364 = vmatpush1.msra.mxu0 0.0
    %365 = vmatprep.subr.mxu0 0.0
    %366 = vmatpush1.msra.mxu0 0.0
    %367 = vmatprep.subr.mxu0 0.0
    %368 = vmatpush1.msra.mxu0 0.0
    %369 = vmatprep.subr.mxu0 0.0
    %370 = vmatpush1.msra.mxu0 0.0
    %371 = vmatprep.subr.mxu0 0.0
    %372 = vmatpush1.msra.mxu0 0.0
    %373 = vmatprep.subr.mxu0 0.0
    %374 = vmatpush1.msra.mxu0 0.0
    %375 = vmatprep.subr.mxu0 0.0
    %376 = vmatpush1.msra.mxu0 0.0
    %377 = vmatprep.subr.mxu0 0.0
    %378 = vmatpush1.msra.mxu0 0.0
    %379 = vmatprep.subr.mxu0 0.0
    %380 = vmatpush1.msra.mxu0 0.0
    %381 = vmatprep.subr.mxu0 0.0
    %382 = vmatpush1.msra.mxu0 0.0
    %383 = vmatprep.subr.mxu0 0.0
    %384 = vmatpush1.msra.mxu0 0.0
    %385 = vmatprep.subr.mxu0 0.0
    %386 = vmatpush1.msra.mxu0 0.0
    %387 = vmatprep.subr.mxu0 0.0
    %388 = vmatpush1.msra.mxu0 0.0
    %389 = vmatprep.subr.mxu0 0.0
    %390 = vmatpush1.msra.mxu0 0.0
    %391 = vmatprep.mubr.f32.mxu0 0.0
    %392 = vmatmul.mubr.f32.gmra.mrb[0].mxu0 %v325
    %v393 = vpop.f32.mrb[0].mxu0
    %v394 = vadd.f32 0.0, %v393
    %v395 = vpop.f32.mrb[0].mxu0
    %v396 = vadd.f32 0.0, %v395
    %397 = vdwg.mxu0
    %v400 = vcombine.low %v394, %v396
    %v402 = vunpack.c.l.s4 1983009808
    %v403 = vunpack.c.0.s8 %v402
    %v404 = vlaneseq
    %v405 = vshrl.u32 %v404, 7
    %v406 = vsub.s32 %v403, %v405
    %v407 = vrot.slane %v400, %v406
    %v409 = vadd.f32 %v323, %v407
    %v410 = vxor.u32 %v409, 2147483648
    %v411 = vmul.f32 %v410, 1.442695
    %v412 = vpow.pop %v411
    %v413 = vadd.f32 %v412, 1.0
    %v414 = vrcp.pop %v413
    %v415 = vmul.f32 1.0, %v414
    %v417 = vrot.slane %v409, 2
    %v419 = vtanh.pop %v417
    %420 = vrot.lane.b32.xlu0 %v409, 64
    %v421 = vpop.permute.xlu0 %420
    %v422 = vrot.slane %v421, 2
    %v424 = vxor.u32 %v422, 2147483648
    %v425 = vmul.f32 %v424, 1.442695
    %v426 = vpow.pop %v425
    %v427 = vadd.f32 %v426, 1.0
    %v428 = vrcp.pop %v427
    %v429 = vmul.f32 1.0, %v428
    %v430 = vmul.f32 %v415, %v313
    %v431 = vmul.f32 %v415, %v419
    %433 = vrot.lane.b32.xlu0 %v431, 64
    %v434 = vpop.permute.xlu0 %433
    %v436 = vadd.f32 %v430, %v434
    %v437 = vtanh.pop %v436
    %439 = vrot.lane.b32.xlu0 %v437, 64
    %v440 = vpop.permute.xlu0 %439
    %v442 = vmul.f32 %v429, %v440
    %s443 = scalar_lea.vmem [#allocation9], 4
    %444 = vst.msk [vmem:[%s443] sm:$0x3] %vm197, %v442
    %s445 = scalar_lea.vmem [#allocation4], 12
    %v446 = vld [vmem:[%s445] sm:$0xf]
    %v448 = vsel %vm66, %v442, 0
    %450 = vmatprep.subr.mxu0 %v48
    %451 = vmatpush1.msra.mxu0 %v47
    %452 = vmatprep.subr.mxu0 %v50
    %453 = vmatpush1.msra.mxu0 %v49
    %454 = vmatprep.subr.mxu0 %v52
    %455 = vmatpush1.msra.mxu0 %v51
    %456 = vmatprep.subr.mxu0 %v54
    %457 = vmatpush1.msra.mxu0 %v53
    %458 = vmatprep.subr.mxu0 %v56
    %459 = vmatpush1.msra.mxu0 %v55
    %460 = vmatprep.subr.mxu0 %v58
    %461 = vmatpush1.msra.mxu0 %v57
    %462 = vmatprep.subr.mxu0 %v60
    %463 = vmatpush1.msra.mxu0 %v59
    %464 = vmatprep.subr.mxu0 %v62
    %465 = vmatpush1.msra.mxu0 %v61
    %466 = vmatprep.subr.mxu0 0.0
    %467 = vmatpush1.msra.mxu0 0.0
    %468 = vmatprep.subr.mxu0 0.0
    %469 = vmatpush1.msra.mxu0 0.0
    %470 = vmatprep.subr.mxu0 0.0
    %471 = vmatpush1.msra.mxu0 0.0
    %472 = vmatprep.subr.mxu0 0.0
    %473 = vmatpush1.msra.mxu0 0.0
    %474 = vmatprep.subr.mxu0 0.0
    %475 = vmatpush1.msra.mxu0 0.0
    %476 = vmatprep.subr.mxu0 0.0
    %477 = vmatpush1.msra.mxu0 0.0
    %478 = vmatprep.subr.mxu0 0.0
    %479 = vmatpush1.msra.mxu0 0.0
    %480 = vmatprep.subr.mxu0 0.0
    %481 = vmatpush1.msra.mxu0 0.0
    %482 = vmatprep.subr.mxu0 0.0
    %483 = vmatpush1.msra.mxu0 0.0
    %484 = vmatprep.subr.mxu0 0.0
    %485 = vmatpush1.msra.mxu0 0.0
    %486 = vmatprep.subr.mxu0 0.0
    %487 = vmatpush1.msra.mxu0 0.0
    %488 = vmatprep.subr.mxu0 0.0
    %489 = vmatpush1.msra.mxu0 0.0
    %490 = vmatprep.subr.mxu0 0.0
    %491 = vmatpush1.msra.mxu0 0.0
    %492 = vmatprep.subr.mxu0 0.0
    %493 = vmatpush1.msra.mxu0 0.0
    %494 = vmatprep.subr.mxu0 0.0
    %495 = vmatpush1.msra.mxu0 0.0
    %496 = vmatprep.subr.mxu0 0.0
    %497 = vmatpush1.msra.mxu0 0.0
    %498 = vmatprep.subr.mxu0 0.0
    %499 = vmatpush1.msra.mxu0 0.0
    %500 = vmatprep.subr.mxu0 0.0
    %501 = vmatpush1.msra.mxu0 0.0
    %502 = vmatprep.subr.mxu0 0.0
    %503 = vmatpush1.msra.mxu0 0.0
    %504 = vmatprep.subr.mxu0 0.0
    %505 = vmatpush1.msra.mxu0 0.0
    %506 = vmatprep.subr.mxu0 0.0
    %507 = vmatpush1.msra.mxu0 0.0
    %508 = vmatprep.subr.mxu0 0.0
    %509 = vmatpush1.msra.mxu0 0.0
    %510 = vmatprep.subr.mxu0 0.0
    %511 = vmatpush1.msra.mxu0 0.0
    %512 = vmatprep.subr.mxu0 0.0
    %513 = vmatpush1.msra.mxu0 0.0
    %514 = vmatprep.mubr.f32.mxu0 0.0
    %515 = vmatmul.mubr.f32.gmra.mrb[0].mxu0 %v448
    %v516 = vpop.f32.mrb[0].mxu0
    %v517 = vadd.f32 0.0, %v516
    %v518 = vpop.f32.mrb[0].mxu0
    %v519 = vadd.f32 0.0, %v518
    %520 = vdwg.mxu0
    %v523 = vcombine.low %v517, %v519
    %v525 = vunpack.c.l.s4 1983009808
    %v526 = vunpack.c.0.s8 %v525
    %v527 = vlaneseq
    %v528 = vshrl.u32 %v527, 7
    %v529 = vsub.s32 %v526, %v528
    %v530 = vrot.slane %v523, %v529
    %v532 = vadd.f32 %v446, %v530
    %v533 = vxor.u32 %v532, 2147483648
    %v534 = vmul.f32 %v533, 1.442695
    %v535 = vpow.pop %v534
    %v536 = vadd.f32 %v535, 1.0
    %v537 = vrcp.pop %v536
    %v538 = vmul.f32 1.0, %v537
    %v540 = vrot.slane %v532, 2
    %v542 = vtanh.pop %v540
    %543 = vrot.lane.b32.xlu0 %v532, 64
    %v544 = vpop.permute.xlu0 %543
    %v545 = vrot.slane %v544, 2
    %v547 = vxor.u32 %v545, 2147483648
    %v548 = vmul.f32 %v547, 1.442695
    %v549 = vpow.pop %v548
    %v550 = vadd.f32 %v549, 1.0
    %v551 = vrcp.pop %v550
    %v552 = vmul.f32 1.0, %v551
    %v553 = vmul.f32 %v538, %v436
    %v554 = vmul.f32 %v538, %v542
    %556 = vrot.lane.b32.xlu0 %v554, 64
    %v557 = vpop.permute.xlu0 %556
    %v559 = vadd.f32 %v553, %v557
    %v560 = vtanh.pop %v559
    %562 = vrot.lane.b32.xlu0 %v560, 64
    %v563 = vpop.permute.xlu0 %562
    %v565 = vmul.f32 %v552, %v563
    %s566 = scalar_lea.vmem [#allocation9], 6
    %567 = vst.msk [vmem:[%s566] sm:$0x3] %vm197, %v565
    %s568 = scalar_lea.vmem [#allocation4], 16
    %v569 = vld [vmem:[%s568] sm:$0xf]
    %v571 = vsel %vm66, %v565, 0
    %573 = vmatprep.subr.mxu0 %v48
    %574 = vmatpush1.msra.mxu0 %v47
    %575 = vmatprep.subr.mxu0 %v50
    %576 = vmatpush1.msra.mxu0 %v49
    %577 = vmatprep.subr.mxu0 %v52
    %578 = vmatpush1.msra.mxu0 %v51
    %579 = vmatprep.subr.mxu0 %v54
    %580 = vmatpush1.msra.mxu0 %v53
    %581 = vmatprep.subr.mxu0 %v56
    %582 = vmatpush1.msra.mxu0 %v55
    %583 = vmatprep.subr.mxu0 %v58
    %584 = vmatpush1.msra.mxu0 %v57
    %585 = vmatprep.subr.mxu0 %v60
    %586 = vmatpush1.msra.mxu0 %v59
    %587 = vmatprep.subr.mxu0 %v62
    %588 = vmatpush1.msra.mxu0 %v61
    %589 = vmatprep.subr.mxu0 0.0
    %590 = vmatpush1.msra.mxu0 0.0
    %591 = vmatprep.subr.mxu0 0.0
    %592 = vmatpush1.msra.mxu0 0.0
    %593 = vmatprep.subr.mxu0 0.0
    %594 = vmatpush1.msra.mxu0 0.0
    %595 = vmatprep.subr.mxu0 0.0
    %596 = vmatpush1.msra.mxu0 0.0
    %597 = vmatprep.subr.mxu0 0.0
    %598 = vmatpush1.msra.mxu0 0.0
    %599 = vmatprep.subr.mxu0 0.0
    %600 = vmatpush1.msra.mxu0 0.0
    %601 = vmatprep.subr.mxu0 0.0
    %602 = vmatpush1.msra.mxu0 0.0
    %603 = vmatprep.subr.mxu0 0.0
    %604 = vmatpush1.msra.mxu0 0.0
    %605 = vmatprep.subr.mxu0 0.0
    %606 = vmatpush1.msra.mxu0 0.0
    %607 = vmatprep.subr.mxu0 0.0
    %608 = vmatpush1.msra.mxu0 0.0
    %609 = vmatprep.subr.mxu0 0.0
    %610 = vmatpush1.msra.mxu0 0.0
    %611 = vmatprep.subr.mxu0 0.0
    %612 = vmatpush1.msra.mxu0 0.0
    %613 = vmatprep.subr.mxu0 0.0
    %614 = vmatpush1.msra.mxu0 0.0
    %615 = vmatprep.subr.mxu0 0.0
    %616 = vmatpush1.msra.mxu0 0.0
    %617 = vmatprep.subr.mxu0 0.0
    %618 = vmatpush1.msra.mxu0 0.0
    %619 = vmatprep.subr.mxu0 0.0
    %620 = vmatpush1.msra.mxu0 0.0
    %621 = vmatprep.subr.mxu0 0.0
    %622 = vmatpush1.msra.mxu0 0.0
    %623 = vmatprep.subr.mxu0 0.0
    %624 = vmatpush1.msra.mxu0 0.0
    %625 = vmatprep.subr.mxu0 0.0
    %626 = vmatpush1.msra.mxu0 0.0
    %627 = vmatprep.subr.mxu0 0.0
    %628 = vmatpush1.msra.mxu0 0.0
    %629 = vmatprep.subr.mxu0 0.0
    %630 = vmatpush1.msra.mxu0 0.0
    %631 = vmatprep.subr.mxu0 0.0
    %632 = vmatpush1.msra.mxu0 0.0
    %633 = vmatprep.subr.mxu0 0.0
    %634 = vmatpush1.msra.mxu0 0.0
    %635 = vmatprep.subr.mxu0 0.0
    %636 = vmatpush1.msra.mxu0 0.0
    %637 = vmatprep.mubr.f32.mxu0 0.0
    %638 = vmatmul.mubr.f32.gmra.mrb[0].mxu0 %v571
    %v639 = vpop.f32.mrb[0].mxu0
    %v640 = vadd.f32 0.0, %v639
    %v641 = vpop.f32.mrb[0].mxu0
    %v642 = vadd.f32 0.0, %v641
    %643 = vdwg.mxu0
    %v646 = vcombine.low %v640, %v642
    %v648 = vunpack.c.l.s4 1983009808
    %v649 = vunpack.c.0.s8 %v648
    %v650 = vlaneseq
    %v651 = vshrl.u32 %v650, 7
    %v652 = vsub.s32 %v649, %v651
    %v653 = vrot.slane %v646, %v652
    %v655 = vadd.f32 %v569, %v653
    %v656 = vxor.u32 %v655, 2147483648
    %v657 = vmul.f32 %v656, 1.442695
    %v658 = vpow.pop %v657
    %v659 = vadd.f32 %v658, 1.0
    %v660 = vrcp.pop %v659
    %v661 = vmul.f32 1.0, %v660
    %v663 = vrot.slane %v655, 2
    %v665 = vtanh.pop %v663
    %666 = vrot.lane.b32.xlu0 %v655, 64
    %v667 = vpop.permute.xlu0 %666
    %v668 = vrot.slane %v667, 2
    %v670 = vxor.u32 %v668, 2147483648
    %v671 = vmul.f32 %v670, 1.442695
    %v672 = vpow.pop %v671
    %v673 = vadd.f32 %v672, 1.0
    %v674 = vrcp.pop %v673
    %v675 = vmul.f32 1.0, %v674
    %v676 = vmul.f32 %v661, %v559
    %v677 = vmul.f32 %v661, %v665
    %679 = vrot.lane.b32.xlu0 %v677, 64
    %v680 = vpop.permute.xlu0 %679
    %v682 = vadd.f32 %v676, %v680
    %v683 = vtanh.pop %v682
    %685 = vrot.lane.b32.xlu0 %v683, 64
    %v686 = vpop.permute.xlu0 %685
    %v688 = vmul.f32 %v675, %v686
    %s689 = scalar_lea.vmem [#allocation9], 8
    %690 = vst.msk [vmem:[%s689] sm:$0x3] %vm197, %v688
    %s691 = scalar_lea.vmem [#allocation4], 20
    %v692 = vld [vmem:[%s691] sm:$0xf]
    %v694 = vsel %vm66, %v688, 0
    %696 = vmatprep.subr.mxu0 %v48
    %697 = vmatpush1.msra.mxu0 %v47
    %698 = vmatprep.subr.mxu0 %v50
    %699 = vmatpush1.msra.mxu0 %v49
    %700 = vmatprep.subr.mxu0 %v52
    %701 = vmatpush1.msra.mxu0 %v51
    %702 = vmatprep.subr.mxu0 %v54
    %703 = vmatpush1.msra.mxu0 %v53
    %704 = vmatprep.subr.mxu0 %v56
    %705 = vmatpush1.msra.mxu0 %v55
    %706 = vmatprep.subr.mxu0 %v58
    %707 = vmatpush1.msra.mxu0 %v57
    %708 = vmatprep.subr.mxu0 %v60
    %709 = vmatpush1.msra.mxu0 %v59
    %710 = vmatprep.subr.mxu0 %v62
    %711 = vmatpush1.msra.mxu0 %v61
    %712 = vmatprep.subr.mxu0 0.0
    %713 = vmatpush1.msra.mxu0 0.0
    %714 = vmatprep.subr.mxu0 0.0
    %715 = vmatpush1.msra.mxu0 0.0
    %716 = vmatprep.subr.mxu0 0.0
    %717 = vmatpush1.msra.mxu0 0.0
    %718 = vmatprep.subr.mxu0 0.0
    %719 = vmatpush1.msra.mxu0 0.0
    %720 = vmatprep.subr.mxu0 0.0
    %721 = vmatpush1.msra.mxu0 0.0
    %722 = vmatprep.subr.mxu0 0.0
    %723 = vmatpush1.msra.mxu0 0.0
    %724 = vmatprep.subr.mxu0 0.0
    %725 = vmatpush1.msra.mxu0 0.0
    %726 = vmatprep.subr.mxu0 0.0
    %727 = vmatpush1.msra.mxu0 0.0
    %728 = vmatprep.subr.mxu0 0.0
    %729 = vmatpush1.msra.mxu0 0.0
    %730 = vmatprep.subr.mxu0 0.0
    %731 = vmatpush1.msra.mxu0 0.0
    %732 = vmatprep.subr.mxu0 0.0
    %733 = vmatpush1.msra.mxu0 0.0
    %734 = vmatprep.subr.mxu0 0.0
    %735 = vmatpush1.msra.mxu0 0.0
    %736 = vmatprep.subr.mxu0 0.0
    %737 = vmatpush1.msra.mxu0 0.0
    %738 = vmatprep.subr.mxu0 0.0
    %739 = vmatpush1.msra.mxu0 0.0
    %740 = vmatprep.subr.mxu0 0.0
    %741 = vmatpush1.msra.mxu0 0.0
    %742 = vmatprep.subr.mxu0 0.0
    %743 = vmatpush1.msra.mxu0 0.0
    %744 = vmatprep.subr.mxu0 0.0
    %745 = vmatpush1.msra.mxu0 0.0
    %746 = vmatprep.subr.mxu0 0.0
    %747 = vmatpush1.msra.mxu0 0.0
    %748 = vmatprep.subr.mxu0 0.0
    %749 = vmatpush1.msra.mxu0 0.0
    %750 = vmatprep.subr.mxu0 0.0
    %751 = vmatpush1.msra.mxu0 0.0
    %752 = vmatprep.subr.mxu0 0.0
    %753 = vmatpush1.msra.mxu0 0.0
    %754 = vmatprep.subr.mxu0 0.0
    %755 = vmatpush1.msra.mxu0 0.0
    %756 = vmatprep.subr.mxu0 0.0
    %757 = vmatpush1.msra.mxu0 0.0
    %758 = vmatprep.subr.mxu0 0.0
    %759 = vmatpush1.msra.mxu0 0.0
    %760 = vmatprep.mubr.f32.mxu0 0.0
    %761 = vmatmul.mubr.f32.gmra.mrb[0].mxu0 %v694
    %v762 = vpop.f32.mrb[0].mxu0
    %v763 = vadd.f32 0.0, %v762
    %v764 = vpop.f32.mrb[0].mxu0
    %v765 = vadd.f32 0.0, %v764
    %766 = vdwg.mxu0
    %v769 = vcombine.low %v763, %v765
    %v771 = vunpack.c.l.s4 1983009808
    %v772 = vunpack.c.0.s8 %v771
    %v773 = vlaneseq
    %v774 = vshrl.u32 %v773, 7
    %v775 = vsub.s32 %v772, %v774
    %v776 = vrot.slane %v769, %v775
    %v778 = vadd.f32 %v692, %v776
    %v779 = vxor.u32 %v778, 2147483648
    %v780 = vmul.f32 %v779, 1.442695
    %v781 = vpow.pop %v780
    %v782 = vadd.f32 %v781, 1.0
    %v783 = vrcp.pop %v782
    %v784 = vmul.f32 1.0, %v783
    %v786 = vrot.slane %v778, 2
    %v788 = vtanh.pop %v786
    %789 = vrot.lane.b32.xlu0 %v778, 64
    %v790 = vpop.permute.xlu0 %789
    %v791 = vrot.slane %v790, 2
    %v793 = vxor.u32 %v791, 2147483648
    %v794 = vmul.f32 %v793, 1.442695
    %v795 = vpow.pop %v794
    %v796 = vadd.f32 %v795, 1.0
    %v797 = vrcp.pop %v796
    %v798 = vmul.f32 1.0, %v797
    %v799 = vmul.f32 %v784, %v682
    %v800 = vmul.f32 %v784, %v788
    %802 = vrot.lane.b32.xlu0 %v800, 64
    %v803 = vpop.permute.xlu0 %802
    %v805 = vadd.f32 %v799, %v803
    %v806 = vtanh.pop %v805
    %808 = vrot.lane.b32.xlu0 %v806, 64
    %v809 = vpop.permute.xlu0 %808
    %v811 = vmul.f32 %v798, %v809
    %s812 = scalar_lea.vmem [#allocation9], 10
    %813 = vst.msk [vmem:[%s812] sm:$0x3] %vm197, %v811
    %s814 = scalar_lea.vmem [#allocation4], 24
    %v815 = vld [vmem:[%s814] sm:$0xf]
    %v817 = vsel %vm66, %v811, 0
    %819 = vmatprep.subr.mxu0 %v48
    %820 = vmatpush1.msra.mxu0 %v47
    %821 = vmatprep.subr.mxu0 %v50
    %822 = vmatpush1.msra.mxu0 %v49
    %823 = vmatprep.subr.mxu0 %v52
    %824 = vmatpush1.msra.mxu0 %v51
    %825 = vmatprep.subr.mxu0 %v54
    %826 = vmatpush1.msra.mxu0 %v53
    %827 = vmatprep.subr.mxu0 %v56
    %828 = vmatpush1.msra.mxu0 %v55
    %829 = vmatprep.subr.mxu0 %v58
    %830 = vmatpush1.msra.mxu0 %v57
    %831 = vmatprep.subr.mxu0 %v60
    %832 = vmatpush1.msra.mxu0 %v59
    %833 = vmatprep.subr.mxu0 %v62
    %834 = vmatpush1.msra.mxu0 %v61
    %835 = vmatprep.subr.mxu0 0.0
    %836 = vmatpush1.msra.mxu0 0.0
    %837 = vmatprep.subr.mxu0 0.0
    %838 = vmatpush1.msra.mxu0 0.0
    %839 = vmatprep.subr.mxu0 0.0
    %840 = vmatpush1.msra.mxu0 0.0
    %841 = vmatprep.subr.mxu0 0.0
    %842 = vmatpush1.msra.mxu0 0.0
    %843 = vmatprep.subr.mxu0 0.0
    %844 = vmatpush1.msra.mxu0 0.0
    %845 = vmatprep.subr.mxu0 0.0
    %846 = vmatpush1.msra.mxu0 0.0
    %847 = vmatprep.subr.mxu0 0.0
    %848 = vmatpush1.msra.mxu0 0.0
    %849 = vmatprep.subr.mxu0 0.0
    %850 = vmatpush1.msra.mxu0 0.0
    %851 = vmatprep.subr.mxu0 0.0
    %852 = vmatpush1.msra.mxu0 0.0
    %853 = vmatprep.subr.mxu0 0.0
    %854 = vmatpush1.msra.mxu0 0.0
    %855 = vmatprep.subr.mxu0 0.0
    %856 = vmatpush1.msra.mxu0 0.0
    %857 = vmatprep.subr.mxu0 0.0
    %858 = vmatpush1.msra.mxu0 0.0
    %859 = vmatprep.subr.mxu0 0.0
    %860 = vmatpush1.msra.mxu0 0.0
    %861 = vmatprep.subr.mxu0 0.0
    %862 = vmatpush1.msra.mxu0 0.0
    %863 = vmatprep.subr.mxu0 0.0
    %864 = vmatpush1.msra.mxu0 0.0
    %865 = vmatprep.subr.mxu0 0.0
    %866 = vmatpush1.msra.mxu0 0.0
    %867 = vmatprep.subr.mxu0 0.0
    %868 = vmatpush1.msra.mxu0 0.0
    %869 = vmatprep.subr.mxu0 0.0
    %870 = vmatpush1.msra.mxu0 0.0
    %871 = vmatprep.subr.mxu0 0.0
    %872 = vmatpush1.msra.mxu0 0.0
    %873 = vmatprep.subr.mxu0 0.0
    %874 = vmatpush1.msra.mxu0 0.0
    %875 = vmatprep.subr.mxu0 0.0
    %876 = vmatpush1.msra.mxu0 0.0
    %877 = vmatprep.subr.mxu0 0.0
    %878 = vmatpush1.msra.mxu0 0.0
    %879 = vmatprep.subr.mxu0 0.0
    %880 = vmatpush1.msra.mxu0 0.0
    %881 = vmatprep.subr.mxu0 0.0
    %882 = vmatpush1.msra.mxu0 0.0
    %883 = vmatprep.mubr.f32.mxu0 0.0
    %884 = vmatmul.mubr.f32.gmra.mrb[0].mxu0 %v817
    %v885 = vpop.f32.mrb[0].mxu0
    %v886 = vadd.f32 0.0, %v885
    %v887 = vpop.f32.mrb[0].mxu0
    %v888 = vadd.f32 0.0, %v887
    %889 = vdwg.mxu0
    %v892 = vcombine.low %v886, %v888
    %v894 = vunpack.c.l.s4 1983009808
    %v895 = vunpack.c.0.s8 %v894
    %v896 = vlaneseq
    %v897 = vshrl.u32 %v896, 7
    %v898 = vsub.s32 %v895, %v897
    %v899 = vrot.slane %v892, %v898
    %v901 = vadd.f32 %v815, %v899
    %v902 = vxor.u32 %v901, 2147483648
    %v903 = vmul.f32 %v902, 1.442695
    %v904 = vpow.pop %v903
    %v905 = vadd.f32 %v904, 1.0
    %v906 = vrcp.pop %v905
    %v907 = vmul.f32 1.0, %v906
    %v909 = vrot.slane %v901, 2
    %v911 = vtanh.pop %v909
    %912 = vrot.lane.b32.xlu0 %v901, 64
    %v913 = vpop.permute.xlu0 %912
    %v914 = vrot.slane %v913, 2
    %v916 = vxor.u32 %v914, 2147483648
    %v917 = vmul.f32 %v916, 1.442695
    %v918 = vpow.pop %v917
    %v919 = vadd.f32 %v918, 1.0
    %v920 = vrcp.pop %v919
    %v921 = vmul.f32 1.0, %v920
    %v922 = vmul.f32 %v907, %v805
    %v923 = vmul.f32 %v907, %v911
    %925 = vrot.lane.b32.xlu0 %v923, 64
    %v926 = vpop.permute.xlu0 %925
    %v928 = vadd.f32 %v922, %v926
    %v929 = vtanh.pop %v928
    %931 = vrot.lane.b32.xlu0 %v929, 64
    %v932 = vpop.permute.xlu0 %931
    %v934 = vmul.f32 %v921, %v932
    %s935 = scalar_lea.vmem [#allocation9], 12
    %936 = vst.msk [vmem:[%s935] sm:$0x3] %vm197, %v934
    %s937 = scalar_lea.vmem [#allocation4], 28
    %v938 = vld [vmem:[%s937] sm:$0xf]
    %v940 = vsel %vm66, %v934, 0
    %942 = vmatprep.subr.mxu0 %v48
    %943 = vmatpush1.msra.mxu0 %v47
    %944 = vmatprep.subr.mxu0 %v50
    %945 = vmatpush1.msra.mxu0 %v49
    %946 = vmatprep.subr.mxu0 %v52
    %947 = vmatpush1.msra.mxu0 %v51
    %948 = vmatprep.subr.mxu0 %v54
    %949 = vmatpush1.msra.mxu0 %v53
    %950 = vmatprep.subr.mxu0 %v56
    %951 = vmatpush1.msra.mxu0 %v55
    %952 = vmatprep.subr.mxu0 %v58
    %953 = vmatpush1.msra.mxu0 %v57
    %954 = vmatprep.subr.mxu0 %v60
    %955 = vmatpush1.msra.mxu0 %v59
    %956 = vmatprep.subr.mxu0 %v62
    %957 = vmatpush1.msra.mxu0 %v61
    %958 = vmatprep.subr.mxu0 0.0
    %959 = vmatpush1.msra.mxu0 0.0
    %960 = vmatprep.subr.mxu0 0.0
    %961 = vmatpush1.msra.mxu0 0.0
    %962 = vmatprep.subr.mxu0 0.0
    %963 = vmatpush1.msra.mxu0 0.0
    %964 = vmatprep.subr.mxu0 0.0
    %965 = vmatpush1.msra.mxu0 0.0
    %966 = vmatprep.subr.mxu0 0.0
    %967 = vmatpush1.msra.mxu0 0.0
    %968 = vmatprep.subr.mxu0 0.0
    %969 = vmatpush1.msra.mxu0 0.0
    %970 = vmatprep.subr.mxu0 0.0
    %971 = vmatpush1.msra.mxu0 0.0
    %972 = vmatprep.subr.mxu0 0.0
    %973 = vmatpush1.msra.mxu0 0.0
    %974 = vmatprep.subr.mxu0 0.0
    %975 = vmatpush1.msra.mxu0 0.0
    %976 = vmatprep.subr.mxu0 0.0
    %977 = vmatpush1.msra.mxu0 0.0
    %978 = vmatprep.subr.mxu0 0.0
    %979 = vmatpush1.msra.mxu0 0.0
    %980 = vmatprep.subr.mxu0 0.0
    %981 = vmatpush1.msra.mxu0 0.0
    %982 = vmatprep.subr.mxu0 0.0
    %983 = vmatpush1.msra.mxu0 0.0
    %984 = vmatprep.subr.mxu0 0.0
    %985 = vmatpush1.msra.mxu0 0.0
    %986 = vmatprep.subr.mxu0 0.0
    %987 = vmatpush1.msra.mxu0 0.0
    %988 = vmatprep.subr.mxu0 0.0
    %989 = vmatpush1.msra.mxu0 0.0
    %990 = vmatprep.subr.mxu0 0.0
    %991 = vmatpush1.msra.mxu0 0.0
    %992 = vmatprep.subr.mxu0 0.0
    %993 = vmatpush1.msra.mxu0 0.0
    %994 = vmatprep.subr.mxu0 0.0
    %995 = vmatpush1.msra.mxu0 0.0
    %996 = vmatprep.subr.mxu0 0.0
    %997 = vmatpush1.msra.mxu0 0.0
    %998 = vmatprep.subr.mxu0 0.0
    %999 = vmatpush1.msra.mxu0 0.0
    %1000 = vmatprep.subr.mxu0 0.0
    %1001 = vmatpush1.msra.mxu0 0.0
    %1002 = vmatprep.subr.mxu0 0.0
    %1003 = vmatpush1.msra.mxu0 0.0
    %1004 = vmatprep.subr.mxu0 0.0
    %1005 = vmatpush1.msra.mxu0 0.0
    %1006 = vmatprep.mubr.f32.mxu0 0.0
    %1007 = vmatmul.mubr.f32.gmra.mrb[0].mxu0 %v940
    %v1008 = vpop.f32.mrb[0].mxu0
    %v1009 = vadd.f32 0.0, %v1008
    %v1010 = vpop.f32.mrb[0].mxu0
    %v1011 = vadd.f32 0.0, %v1010
    %1012 = vdwg.mxu0
    %v1015 = vcombine.low %v1009, %v1011
    %v1017 = vunpack.c.l.s4 1983009808
    %v1018 = vunpack.c.0.s8 %v1017
    %v1019 = vlaneseq
    %v1020 = vshrl.u32 %v1019, 7
    %v1021 = vsub.s32 %v1018, %v1020
    %v1022 = vrot.slane %v1015, %v1021
    %v1024 = vadd.f32 %v938, %v1022
    %v1025 = vxor.u32 %v1024, 2147483648
    %v1026 = vmul.f32 %v1025, 1.442695
    %v1027 = vpow.pop %v1026
    %v1028 = vadd.f32 %v1027, 1.0
    %v1029 = vrcp.pop %v1028
    %v1030 = vmul.f32 1.0, %v1029
    %v1032 = vrot.slane %v1024, 2
    %v1034 = vtanh.pop %v1032
    %1035 = vrot.lane.b32.xlu0 %v1024, 64
    %v1036 = vpop.permute.xlu0 %1035
    %v1037 = vrot.slane %v1036, 2
    %v1039 = vxor.u32 %v1037, 2147483648
    %v1040 = vmul.f32 %v1039, 1.442695
    %v1041 = vpow.pop %v1040
    %v1042 = vadd.f32 %v1041, 1.0
    %v1043 = vrcp.pop %v1042
    %v1044 = vmul.f32 1.0, %v1043
    %v1045 = vmul.f32 %v1030, %v928
    %v1046 = vmul.f32 %v1030, %v1034
    %1048 = vrot.lane.b32.xlu0 %v1046, 64
    %v1049 = vpop.permute.xlu0 %1048
    %v1051 = vadd.f32 %v1045, %v1049
    %v1052 = vtanh.pop %v1051
    %1054 = vrot.lane.b32.xlu0 %v1052, 64
    %v1055 = vpop.permute.xlu0 %1054
    %v1057 = vmul.f32 %v1044, %v1055
    %s1058 = scalar_lea.vmem [#allocation9], 14
    %1059 = vst.msk [vmem:[%s1058] sm:$0x3] %vm197, %v1057
    %1060 = vst.msk [vmem:[#allocation2] sm:$0x3] %vm197, %v1057
    %v1063 = vunpack.c.l.s4 1983009808
    %v1064 = vunpack.c.0.s8 %v1063
    %v1065 = vlaneseq
    %v1066 = vshrl.u32 %v1065, 7
    %v1067 = vsub.s32 %v1064, %v1066
    %v1068 = vrot.slane %v1051, %v1067
    %1069 = vrot.lane.b32.xlu0 %v1068, 64
    %v1070 = vpop.permute.xlu0 %1069
    %1072 = vst.msk [vmem:[#allocation3] sm:$0x3] %vm197, %v1070
    // Predicated region
    $region22: #{tpu_custom_call.1} parent=1 // pred_check
      _
    $region23: #{tpu_custom_call.1} parent=1 // pred_check_branch
      %1074 = sbr.rel (0) target = $region25
    $region24: #{tpu_custom_call.1} parent=1 // pred_region
      %s1076 = ssub.s32 256, 256
      %1077 = vsyncadd [#allocation6], %s1076
      %s1078 = sshll.u32 [#allocation9], 4
      %s1079 = int_to_ptr.vmem [resolvable:$true] %s1078
      %1084 = dma.vmem_to_hbm [thread:$0]  %s1079, 256, %s2, [#allocation6], 32, 32, 2
    $region25: #{tpu_custom_call.1} parent=1 // pred_fallthru
      _
    // Predicated region
    $region26: #{tpu_custom_call.1} parent=1 // pred_check
      _
    $region27: #{tpu_custom_call.1} parent=1 // pred_check_branch
      %1086 = sbr.rel (0) target = $region29
    $region28: #{tpu_custom_call.1} parent=1 // pred_region
      %1087 = dma.done [#allocation6], 256
    $region29: #{tpu_custom_call.1} parent=1 // pred_fallthru
      _
    %1088 = vsyncpa [#allocation5], 1
    %1089 = vsyncpa [#allocation8], 1
    %1090 = vsyncpa [#allocation6], 1

</llo_original>
